<compile_context>
chip_gen: v7x
topology: tpu7x:2x2x1
jax: 0.10.0
libtpu: 0.0.40
codegen_flags: <defaults>
</compile_context>

<pallas_src>
import functools
import math

import jax
import jax.numpy as jnp
from jax.experimental import pallas as pl
from jax.experimental.pallas import tpu as pltpu


def _norm(x, alpha, bias, eps=1e-6):
    # PyTorch `Norm`: alpha * (x - mean) / (std + eps) + bias
    # torch.std defaults to the UNBIASED estimator (ddof=1) -> divide by (N-1).
    n = x.shape[-1]
    mean = jnp.sum(x, axis=-1, keepdims=True) * (1.0 / n)
    centered = x - mean
    var = jnp.sum(centered * centered, axis=-1, keepdims=True) * (1.0 / (n - 1))
    std = jnp.sqrt(var)
    inv = pl.reciprocal(std + eps, approx=True)          # EUP, not a VALU divide
    return alpha * centered * inv + bias


def _softmax_last(s):
    m = jnp.max(s, axis=-1, keepdims=True)
    e = jnp.exp(s - m)
    denom = jnp.sum(e, axis=-1, keepdims=True)
    return e * pl.reciprocal(denom, approx=True)         # EUP, not a VALU divide


def encdec_kernel(x_ref,
                  n1_a, n1_b,
                  wqkv, bqkv, wo, bo,
                  n1l_a, n1l_b,
                  w1, b1,
                  n2l_a, n2l_b,
                  w2, b2,
                  n2_a, n2_b,
                  wff, bff,
                  o_ref,
                  *, heads, d_k, bt, seq):
    # TODO(synk): mask is None in this implementation (module default); the
    # masked_fill branch of `attention` is not exercised.
    D = heads * d_k
    N = bt * seq

    # Flatten the batch tile into rows for all row-wise ops (cheap reshape:
    # merges leading dims only).
    x = x_ref[...].reshape(N, D)                           # (N, D)

    # ---- x2 = norm_1(x) ----
    x2 = _norm(x, n1_a[...], n1_b[...])

    # ---- fused QKV projection: one (N, D) @ (D, 3D) matmul ----
    qkv = jnp.dot(x2, wqkv[...], preferred_element_type=jnp.float32) + bqkv[...]
    scale = 1.0 / math.sqrt(d_k)
    q = (qkv[:, :D] * scale).reshape(bt, seq, D)           # scale folded into Q once
    k = qkv[:, D:2 * D].reshape(bt, seq, D)
    v = qkv[:, 2 * D:].reshape(bt, seq, D)

    # ---- multi-head self-attention, batched over the tile ----
    wo_v = wo[...]
    attn = jnp.zeros((N, D), jnp.float32)
    for h in range(heads):                                 # static unroll over heads
        lo, hi = h * d_k, (h + 1) * d_k
        s = jnp.einsum("bqd,bkd->bqk", q[:, :, lo:hi], k[:, :, lo:hi],
                       preferred_element_type=jnp.float32)  # (bt, S, S)
        p = _softmax_last(s)
        oh = jnp.einsum("bqk,bkd->bqd", p, v[:, :, lo:hi],
                        preferred_element_type=jnp.float32)  # (bt, S, d_k)
        # head_out @ wo-rows-of-this-head == concat(heads) @ wo, no concatenate.
        attn = attn + jnp.dot(oh.reshape(N, d_k), wo_v[lo:hi, :],
                              preferred_element_type=jnp.float32)

    # ---- residual (dropout_1 identity in eval) ----
    x = x + attn + bo[...]

    # ---- norm_1_linear -> linear_1 -> norm_2_linear -> linear_2 ----
    x = _norm(x, n1l_a[...], n1l_b[...])
    x = jnp.dot(x, w1[...], preferred_element_type=jnp.float32) + b1[...]   # (N, 4D)
    x = _norm(x, n2l_a[...], n2l_b[...])
    x = jnp.dot(x, w2[...], preferred_element_type=jnp.float32) + b2[...]   # (N, D)

    # ---- x2 = norm_2(x); y = relu(linear(x2)) (dropouts identity) ----
    x2 = _norm(x, n2_a[...], n2_b[...])
    y = jnp.dot(x2, wff[...], preferred_element_type=jnp.float32) + bff[...]
    y = jnp.maximum(y, 0.0)                                 # (N, d_out_padded)

    o_ref[...] = y.reshape(bt, seq, y.shape[-1])


def encoder_decoder_layer(x, params, heads, *, target_rows=256):
    B, S, D = x.shape
    assert D % heads == 0, "d_model must be divisible by heads"
    d_k = D // heads
    d_output = params["wff"].shape[1]
    d_out_pad = ((d_output + 127) // 128) * 128

    # Host-side weight packing: fuse QKV, lane-pad the final projection.
    wqkv = jnp.concatenate([params["wq"], params["wk"], params["wv"]], axis=1)
    bqkv = jnp.concatenate([params["bq"], params["bk"], params["bv"]], axis=1)
    wff = jnp.pad(params["wff"], ((0, 0), (0, d_out_pad - d_output)))
    bff = jnp.pad(params["bff"], ((0, 0), (0, d_out_pad - d_output)))

    # Batch-tile so each grid step feeds the MXU ~target_rows rows (bt | B).
    bt = max(1, min(B, target_rows // max(S, 1)))
    while B % bt:
        bt -= 1
    grid = (B // bt,)

    weights = [
        params["n1_a"], params["n1_b"],
        wqkv, bqkv, params["wo"], params["bo"],
        params["n1l_a"], params["n1l_b"],
        params["w1"], params["b1"],
        params["n2l_a"], params["n2l_b"],
        params["w2"], params["b2"],
        params["n2_a"], params["n2_b"],
        wff, bff,
    ]

    in_specs = [pl.BlockSpec((bt, S, D), lambda b: (b, 0, 0))]
    for w in weights:
        in_specs.append(pl.BlockSpec(w.shape, lambda b, _nd=w.ndim: (0,) * _nd))

    out = pl.pallas_call(
        functools.partial(encdec_kernel, heads=heads, d_k=d_k, bt=bt, seq=S),
        grid=grid,
        in_specs=in_specs,
        out_specs=pl.BlockSpec((bt, S, d_out_pad), lambda b: (b, 0, 0)),
        out_shape=jax.ShapeDtypeStruct((B, S, d_out_pad), jnp.float32),
        compiler_params=pltpu.CompilerParams(
            dimension_semantics=("parallel",)),
    )(x, *weights)
    return out[..., :d_output]


def init_params(key, d_model, d_output):
    """Deterministic init mimicking nn.Linear shapes (weights stored (in, out))."""
    d4 = int(d_model * 4)
    keys = iter(jax.random.split(key, 16))

    def linear(din, dout):
        lim = 1.0 / math.sqrt(din)
        w = jax.random.uniform(next(keys), (din, dout), jnp.float32, -lim, lim)
        b = jax.random.uniform(next(keys), (1, dout), jnp.float32, -lim, lim)
        return w, b

    p = {}
    # Norm params: alpha=ones, bias=zeros (as in the module __init__).
    p["n1_a"] = jnp.ones((1, d_model), jnp.float32)
    p["n1_b"] = jnp.zeros((1, d_model), jnp.float32)
    p["n1l_a"] = jnp.ones((1, d_model), jnp.float32)
    p["n1l_b"] = jnp.zeros((1, d_model), jnp.float32)
    p["n2l_a"] = jnp.ones((1, d4), jnp.float32)
    p["n2l_b"] = jnp.zeros((1, d4), jnp.float32)
    p["n2_a"] = jnp.ones((1, d_model), jnp.float32)
    p["n2_b"] = jnp.zeros((1, d_model), jnp.float32)
    # Attention projections.
    p["wq"], p["bq"] = linear(d_model, d_model)
    p["wk"], p["bk"] = linear(d_model, d_model)
    p["wv"], p["bv"] = linear(d_model, d_model)
    p["wo"], p["bo"] = linear(d_model, d_model)
    # linear_1 / linear_2.
    p["w1"], p["b1"] = linear(d_model, d4)
    p["w2"], p["b2"] = linear(d4, d_model)
    # FeedForward.linear_1.
    p["wff"], p["bff"] = linear(d_model, d_output)
    return p


def reference_forward(x, params, heads):
    """Pure-JAX reference reproducing the PyTorch forward (eval mode)."""
    B, S, D = x.shape
    d_k = D // heads

    def norm(x, a, b, eps=1e-6):
        n = x.shape[-1]
        mean = jnp.mean(x, -1, keepdims=True)
        std = jnp.sqrt(jnp.sum((x - mean) ** 2, -1, keepdims=True) / (n - 1))
        return a * (x - mean) / (std + eps) + b

    x2 = norm(x, params["n1_a"], params["n1_b"])
    q = x2 @ params["wq"] + params["bq"]
    k = x2 @ params["wk"] + params["bk"]
    v = x2 @ params["wv"] + params["bv"]
    q = q.reshape(B, S, heads, d_k).transpose(0, 2, 1, 3)
    k = k.reshape(B, S, heads, d_k).transpose(0, 2, 1, 3)
    v = v.reshape(B, S, heads, d_k).transpose(0, 2, 1, 3)
    scores = jnp.einsum("bhqd,bhkd->bhqk", q, k) / math.sqrt(d_k)
    scores = jax.nn.softmax(scores, axis=-1)
    out = jnp.einsum("bhqk,bhkd->bhqd", scores, v)
    out = out.transpose(0, 2, 1, 3).reshape(B, S, D)
    attn = out @ params["wo"] + params["bo"]
    x = x + attn
    x = norm(x, params["n1l_a"], params["n1l_b"])
    x = x @ params["w1"] + params["b1"]
    x = norm(x, params["n2l_a"], params["n2l_b"])
    x = x @ params["w2"] + params["b2"]
    x2 = norm(x, params["n2_a"], params["n2_b"])
    y = jnp.maximum(x2 @ params["wff"] + params["bff"], 0.0)
    return y


if __name__ == "__main__":
    B, S, D = 2, 8, 32
    heads = 4
    d_output = 32

    key = jax.random.PRNGKey(0)
    k_x, k_p = jax.random.split(key)
    x = jax.random.normal(k_x, (B, S, D), jnp.float32)
    params = init_params(k_p, D, d_output)

    out = encoder_decoder_layer(x, params, heads)
    out = jax.block_until_ready(out)

    ref = reference_forward(x, params, heads)
    assert out.shape == (B, S, d_output)
    # Slightly relaxed tolerance: pl.reciprocal(approx=True) in norm/softmax.
    assert jnp.allclose(out, ref, atol=5e-3, rtol=5e-3), "mismatch vs reference"

    print("KERNEL_OK")
</pallas_src>

<mosaic_0001>
module attributes {stable_mosaic.version = 11 : i64} {
  func.func @encdec_kernel(%arg0: i32, %arg1: memref<2x8x32xf32, #tpu.memory_space<vmem>>, %arg2: memref<1x32xf32, #tpu.memory_space<vmem>>, %arg3: memref<1x32xf32, #tpu.memory_space<vmem>>, %arg4: memref<32x96xf32, #tpu.memory_space<vmem>>, %arg5: memref<1x96xf32, #tpu.memory_space<vmem>>, %arg6: memref<32x32xf32, #tpu.memory_space<vmem>>, %arg7: memref<1x32xf32, #tpu.memory_space<vmem>>, %arg8: memref<1x32xf32, #tpu.memory_space<vmem>>, %arg9: memref<1x32xf32, #tpu.memory_space<vmem>>, %arg10: memref<32x128xf32, #tpu.memory_space<vmem>>, %arg11: memref<1x128xf32, #tpu.memory_space<vmem>>, %arg12: memref<1x128xf32, #tpu.memory_space<vmem>>, %arg13: memref<1x128xf32, #tpu.memory_space<vmem>>, %arg14: memref<128x32xf32, #tpu.memory_space<vmem>>, %arg15: memref<1x32xf32, #tpu.memory_space<vmem>>, %arg16: memref<1x32xf32, #tpu.memory_space<vmem>>, %arg17: memref<1x32xf32, #tpu.memory_space<vmem>>, %arg18: memref<32x128xf32, #tpu.memory_space<vmem>>, %arg19: memref<1x128xf32, #tpu.memory_space<vmem>>, %arg20: memref<2x8x128xf32, #tpu.memory_space<vmem>>) attributes {dimension_semantics = [#tpu.dimension_semantics<parallel>], iteration_bounds = array<i64: 1>, scalar_prefetch = 0 : i64, scratch_operands = 0 : i64, tpu.core_type = #tpu.core_type<tc>, window_params = [{transform_indices = @transform_0, window_bounds = array<i64: 2, 8, 32>}, {pipeline_mode = #tpu.pipeline_mode<synchronous>, transform_indices = @transform_1, window_bounds = array<i64: 1, 32>}, {pipeline_mode = #tpu.pipeline_mode<synchronous>, transform_indices = @transform_2, window_bounds = array<i64: 1, 32>}, {pipeline_mode = #tpu.pipeline_mode<synchronous>, transform_indices = @transform_3, window_bounds = array<i64: 32, 96>}, {pipeline_mode = #tpu.pipeline_mode<synchronous>, transform_indices = @transform_4, window_bounds = array<i64: 1, 96>}, {pipeline_mode = #tpu.pipeline_mode<synchronous>, transform_indices = @transform_5, window_bounds = array<i64: 32, 32>}, {pipeline_mode = #tpu.pipeline_mode<synchronous>, transform_indices = @transform_6, window_bounds = array<i64: 1, 32>}, {pipeline_mode = #tpu.pipeline_mode<synchronous>, transform_indices = @transform_7, window_bounds = array<i64: 1, 32>}, {pipeline_mode = #tpu.pipeline_mode<synchronous>, transform_indices = @transform_8, window_bounds = array<i64: 1, 32>}, {pipeline_mode = #tpu.pipeline_mode<synchronous>, transform_indices = @transform_9, window_bounds = array<i64: 32, 128>}, {pipeline_mode = #tpu.pipeline_mode<synchronous>, transform_indices = @transform_10, window_bounds = array<i64: 1, 128>}, {pipeline_mode = #tpu.pipeline_mode<synchronous>, transform_indices = @transform_11, window_bounds = array<i64: 1, 128>}, {pipeline_mode = #tpu.pipeline_mode<synchronous>, transform_indices = @transform_12, window_bounds = array<i64: 1, 128>}, {pipeline_mode = #tpu.pipeline_mode<synchronous>, transform_indices = @transform_13, window_bounds = array<i64: 128, 32>}, {pipeline_mode = #tpu.pipeline_mode<synchronous>, transform_indices = @transform_14, window_bounds = array<i64: 1, 32>}, {pipeline_mode = #tpu.pipeline_mode<synchronous>, transform_indices = @transform_15, window_bounds = array<i64: 1, 32>}, {pipeline_mode = #tpu.pipeline_mode<synchronous>, transform_indices = @transform_16, window_bounds = array<i64: 1, 32>}, {pipeline_mode = #tpu.pipeline_mode<synchronous>, transform_indices = @transform_17, window_bounds = array<i64: 32, 128>}, {pipeline_mode = #tpu.pipeline_mode<synchronous>, transform_indices = @transform_18, window_bounds = array<i64: 1, 128>}, {transform_indices = @transform_19, window_bounds = array<i64: 2, 8, 128>}]} {
    %c0 = arith.constant 0 : index
    %c0_0 = arith.constant 0 : index
    %c0_1 = arith.constant 0 : index
    %0 = vector.load %arg1[%c0, %c0_0, %c0_1] : memref<2x8x32xf32, #tpu.memory_space<vmem>>, vector<2x8x32xf32>
    %1 = vector.shape_cast %0 : vector<2x8x32xf32> to vector<16x32xf32>
    %c0_2 = arith.constant 0 : index
    %c0_3 = arith.constant 0 : index
    %2 = vector.load %arg2[%c0_2, %c0_3] : memref<1x32xf32, #tpu.memory_space<vmem>>, vector<1x32xf32>
    %c0_4 = arith.constant 0 : index
    %c0_5 = arith.constant 0 : index
    %3 = vector.load %arg3[%c0_4, %c0_5] : memref<1x32xf32, #tpu.memory_space<vmem>>, vector<1x32xf32>
    %cst = arith.constant dense<0.000000e+00> : vector<16xf32>
    %4 = vector.multi_reduction <add>, %1, %cst [1] : vector<16x32xf32> to vector<16xf32>
    %5 = vector.shape_cast %4 : vector<16xf32> to vector<16x1xf32>
    %cst_6 = arith.constant 3.125000e-02 : f32
    %6 = vector.broadcast %cst_6 : f32 to vector<16x1xf32>
    %7 = arith.mulf %5, %6 : vector<16x1xf32>
    %8 = vector.broadcast %7 : vector<16x1xf32> to vector<16x32xf32>
    %9 = arith.subf %1, %8 : vector<16x32xf32>
    %10 = arith.mulf %9, %9 : vector<16x32xf32>
    %cst_7 = arith.constant dense<0.000000e+00> : vector<16xf32>
    %11 = vector.multi_reduction <add>, %10, %cst_7 [1] : vector<16x32xf32> to vector<16xf32>
    %12 = vector.shape_cast %11 : vector<16xf32> to vector<16x1xf32>
    %cst_8 = arith.constant 0.0322580636 : f32
    %13 = vector.broadcast %cst_8 : f32 to vector<16x1xf32>
    %14 = arith.mulf %12, %13 : vector<16x1xf32>
    %15 = math.sqrt %14 : vector<16x1xf32>
    %cst_9 = arith.constant 9.99999997E-7 : f32
    %16 = vector.broadcast %cst_9 : f32 to vector<16x1xf32>
    %17 = arith.addf %15, %16 : vector<16x1xf32>
    %18 = tpu.reciprocal %17 {approx = true} : vector<16x1xf32> -> vector<16x1xf32>
    %19 = vector.broadcast %2 : vector<1x32xf32> to vector<16x32xf32>
    %20 = arith.mulf %19, %9 : vector<16x32xf32>
    %21 = vector.broadcast %18 : vector<16x1xf32> to vector<16x32xf32>
    %22 = arith.mulf %20, %21 : vector<16x32xf32>
    %23 = vector.broadcast %3 : vector<1x32xf32> to vector<16x32xf32>
    %24 = arith.addf %22, %23 : vector<16x32xf32>
    %c0_10 = arith.constant 0 : index
    %c0_11 = arith.constant 0 : index
    %25 = vector.load %arg4[%c0_10, %c0_11] : memref<32x96xf32, #tpu.memory_space<vmem>>, vector<32x96xf32>
    %cst_12 = arith.constant dense<0.000000e+00> : vector<16x96xf32>
    %26 = tpu.matmul %24, %25, %cst_12 {dimension_numbers = #tpu.dot_dimension_numbers<[1], [0], [0], [1], [0, 0, 1, 1], [], []>} : vector<16x32xf32>, vector<32x96xf32>, vector<16x96xf32> -> vector<16x96xf32>
    %c0_13 = arith.constant 0 : index
    %c0_14 = arith.constant 0 : index
    %27 = vector.load %arg5[%c0_13, %c0_14] : memref<1x96xf32, #tpu.memory_space<vmem>>, vector<1x96xf32>
    %28 = vector.broadcast %27 : vector<1x96xf32> to vector<16x96xf32>
    %29 = arith.addf %26, %28 : vector<16x96xf32>
    %30 = vector.extract_strided_slice %29 {offsets = [0, 0], sizes = [16, 32], strides = [1, 1]} : vector<16x96xf32> to vector<16x32xf32>
    %cst_15 = arith.constant 0.353553385 : f32
    %31 = vector.broadcast %cst_15 : f32 to vector<16x32xf32>
    %32 = arith.mulf %30, %31 : vector<16x32xf32>
    %33 = vector.shape_cast %32 : vector<16x32xf32> to vector<2x8x32xf32>
    %34 = vector.extract_strided_slice %29 {offsets = [0, 32], sizes = [16, 32], strides = [1, 1]} : vector<16x96xf32> to vector<16x32xf32>
    %35 = vector.shape_cast %34 : vector<16x32xf32> to vector<2x8x32xf32>
    %36 = vector.extract_strided_slice %29 {offsets = [0, 64], sizes = [16, 32], strides = [1, 1]} : vector<16x96xf32> to vector<16x32xf32>
    %37 = vector.shape_cast %36 : vector<16x32xf32> to vector<2x8x32xf32>
    %c0_16 = arith.constant 0 : index
    %c0_17 = arith.constant 0 : index
    %38 = vector.load %arg6[%c0_16, %c0_17] : memref<32x32xf32, #tpu.memory_space<vmem>>, vector<32x32xf32>
    %cst_18 = arith.constant 0.000000e+00 : f32
    %39 = vector.broadcast %cst_18 : f32 to vector<16x32xf32>
    %40 = vector.extract_strided_slice %33 {offsets = [0, 0, 0], sizes = [2, 8, 8], strides = [1, 1, 1]} : vector<2x8x32xf32> to vector<2x8x8xf32>
    %41 = vector.extract_strided_slice %35 {offsets = [0, 0, 0], sizes = [2, 8, 8], strides = [1, 1, 1]} : vector<2x8x32xf32> to vector<2x8x8xf32>
    "tpu.trace_start"() <{level = 10 : i32, message = "bqd,bkd->bqk"}> : () -> ()
    %cst_19 = arith.constant dense<0.000000e+00> : vector<2x8x8xf32>
    %42 = tpu.matmul %40, %41, %cst_19 {dimension_numbers = #tpu.dot_dimension_numbers<[2], [2], [1], [1], [0, 0, 0, 1, 1, 1], [0], [0]>} : vector<2x8x8xf32>, vector<2x8x8xf32>, vector<2x8x8xf32> -> vector<2x8x8xf32>
    "tpu.trace_stop"() : () -> ()
    %cst_20 = arith.constant dense<0xFF800000> : vector<2x8xf32>
    %43 = vector.multi_reduction <maximumf>, %42, %cst_20 [2] : vector<2x8x8xf32> to vector<2x8xf32>
    %44 = vector.shape_cast %43 : vector<2x8xf32> to vector<2x8x1xf32>
    %45 = vector.broadcast %44 : vector<2x8x1xf32> to vector<2x8x8xf32>
    %46 = arith.subf %42, %45 : vector<2x8x8xf32>
    %47 = math.exp %46 : vector<2x8x8xf32>
    %cst_21 = arith.constant dense<0.000000e+00> : vector<2x8xf32>
    %48 = vector.multi_reduction <add>, %47, %cst_21 [2] : vector<2x8x8xf32> to vector<2x8xf32>
    %49 = vector.shape_cast %48 : vector<2x8xf32> to vector<2x8x1xf32>
    %50 = tpu.reciprocal %49 {approx = true} : vector<2x8x1xf32> -> vector<2x8x1xf32>
    %51 = vector.broadcast %50 : vector<2x8x1xf32> to vector<2x8x8xf32>
    %52 = arith.mulf %47, %51 : vector<2x8x8xf32>
    %53 = vector.extract_strided_slice %37 {offsets = [0, 0, 0], sizes = [2, 8, 8], strides = [1, 1, 1]} : vector<2x8x32xf32> to vector<2x8x8xf32>
    "tpu.trace_start"() <{level = 10 : i32, message = "bqk,bkd->bqd"}> : () -> ()
    %cst_22 = arith.constant dense<0.000000e+00> : vector<2x8x8xf32>
    %54 = tpu.matmul %52, %53, %cst_22 {dimension_numbers = #tpu.dot_dimension_numbers<[2], [1], [1], [2], [0, 0, 0, 1, 1, 2], [0], [0]>} : vector<2x8x8xf32>, vector<2x8x8xf32>, vector<2x8x8xf32> -> vector<2x8x8xf32>
    "tpu.trace_stop"() : () -> ()
    %55 = vector.shape_cast %54 : vector<2x8x8xf32> to vector<16x8xf32>
    %56 = vector.extract_strided_slice %38 {offsets = [0, 0], sizes = [8, 32], strides = [1, 1]} : vector<32x32xf32> to vector<8x32xf32>
    %cst_23 = arith.constant dense<0.000000e+00> : vector<16x32xf32>
    %57 = tpu.matmul %55, %56, %cst_23 {dimension_numbers = #tpu.dot_dimension_numbers<[1], [0], [0], [1], [0, 0, 1, 1], [], []>} : vector<16x8xf32>, vector<8x32xf32>, vector<16x32xf32> -> vector<16x32xf32>
    %58 = arith.addf %39, %57 : vector<16x32xf32>
    %59 = vector.extract_strided_slice %33 {offsets = [0, 0, 8], sizes = [2, 8, 8], strides = [1, 1, 1]} : vector<2x8x32xf32> to vector<2x8x8xf32>
    %60 = vector.extract_strided_slice %35 {offsets = [0, 0, 8], sizes = [2, 8, 8], strides = [1, 1, 1]} : vector<2x8x32xf32> to vector<2x8x8xf32>
    "tpu.trace_start"() <{level = 10 : i32, message = "bqd,bkd->bqk"}> : () -> ()
    %cst_24 = arith.constant dense<0.000000e+00> : vector<2x8x8xf32>
    %61 = tpu.matmul %59, %60, %cst_24 {dimension_numbers = #tpu.dot_dimension_numbers<[2], [2], [1], [1], [0, 0, 0, 1, 1, 1], [0], [0]>} : vector<2x8x8xf32>, vector<2x8x8xf32>, vector<2x8x8xf32> -> vector<2x8x8xf32>
    "tpu.trace_stop"() : () -> ()
    %cst_25 = arith.constant dense<0xFF800000> : vector<2x8xf32>
    %62 = vector.multi_reduction <maximumf>, %61, %cst_25 [2] : vector<2x8x8xf32> to vector<2x8xf32>
    %63 = vector.shape_cast %62 : vector<2x8xf32> to vector<2x8x1xf32>
    %64 = vector.broadcast %63 : vector<2x8x1xf32> to vector<2x8x8xf32>
    %65 = arith.subf %61, %64 : vector<2x8x8xf32>
    %66 = math.exp %65 : vector<2x8x8xf32>
    %cst_26 = arith.constant dense<0.000000e+00> : vector<2x8xf32>
    %67 = vector.multi_reduction <add>, %66, %cst_26 [2] : vector<2x8x8xf32> to vector<2x8xf32>
    %68 = vector.shape_cast %67 : vector<2x8xf32> to vector<2x8x1xf32>
    %69 = tpu.reciprocal %68 {approx = true} : vector<2x8x1xf32> -> vector<2x8x1xf32>
    %70 = vector.broadcast %69 : vector<2x8x1xf32> to vector<2x8x8xf32>
    %71 = arith.mulf %66, %70 : vector<2x8x8xf32>
    %72 = vector.extract_strided_slice %37 {offsets = [0, 0, 8], sizes = [2, 8, 8], strides = [1, 1, 1]} : vector<2x8x32xf32> to vector<2x8x8xf32>
    "tpu.trace_start"() <{level = 10 : i32, message = "bqk,bkd->bqd"}> : () -> ()
    %cst_27 = arith.constant dense<0.000000e+00> : vector<2x8x8xf32>
    %73 = tpu.matmul %71, %72, %cst_27 {dimension_numbers = #tpu.dot_dimension_numbers<[2], [1], [1], [2], [0, 0, 0, 1, 1, 2], [0], [0]>} : vector<2x8x8xf32>, vector<2x8x8xf32>, vector<2x8x8xf32> -> vector<2x8x8xf32>
    "tpu.trace_stop"() : () -> ()
    %74 = vector.shape_cast %73 : vector<2x8x8xf32> to vector<16x8xf32>
    %75 = vector.extract_strided_slice %38 {offsets = [8, 0], sizes = [8, 32], strides = [1, 1]} : vector<32x32xf32> to vector<8x32xf32>
    %cst_28 = arith.constant dense<0.000000e+00> : vector<16x32xf32>
    %76 = tpu.matmul %74, %75, %cst_28 {dimension_numbers = #tpu.dot_dimension_numbers<[1], [0], [0], [1], [0, 0, 1, 1], [], []>} : vector<16x8xf32>, vector<8x32xf32>, vector<16x32xf32> -> vector<16x32xf32>
    %77 = arith.addf %58, %76 : vector<16x32xf32>
    %78 = vector.extract_strided_slice %33 {offsets = [0, 0, 16], sizes = [2, 8, 8], strides = [1, 1, 1]} : vector<2x8x32xf32> to vector<2x8x8xf32>
    %79 = vector.extract_strided_slice %35 {offsets = [0, 0, 16], sizes = [2, 8, 8], strides = [1, 1, 1]} : vector<2x8x32xf32> to vector<2x8x8xf32>
    "tpu.trace_start"() <{level = 10 : i32, message = "bqd,bkd->bqk"}> : () -> ()
    %cst_29 = arith.constant dense<0.000000e+00> : vector<2x8x8xf32>
    %80 = tpu.matmul %78, %79, %cst_29 {dimension_numbers = #tpu.dot_dimension_numbers<[2], [2], [1], [1], [0, 0, 0, 1, 1, 1], [0], [0]>} : vector<2x8x8xf32>, vector<2x8x8xf32>, vector<2x8x8xf32> -> vector<2x8x8xf32>
    "tpu.trace_stop"() : () -> ()
    %cst_30 = arith.constant dense<0xFF800000> : vector<2x8xf32>
    %81 = vector.multi_reduction <maximumf>, %80, %cst_30 [2] : vector<2x8x8xf32> to vector<2x8xf32>
    %82 = vector.shape_cast %81 : vector<2x8xf32> to vector<2x8x1xf32>
    %83 = vector.broadcast %82 : vector<2x8x1xf32> to vector<2x8x8xf32>
    %84 = arith.subf %80, %83 : vector<2x8x8xf32>
    %85 = math.exp %84 : vector<2x8x8xf32>
    %cst_31 = arith.constant dense<0.000000e+00> : vector<2x8xf32>
    %86 = vector.multi_reduction <add>, %85, %cst_31 [2] : vector<2x8x8xf32> to vector<2x8xf32>
    %87 = vector.shape_cast %86 : vector<2x8xf32> to vector<2x8x1xf32>
    %88 = tpu.reciprocal %87 {approx = true} : vector<2x8x1xf32> -> vector<2x8x1xf32>
    %89 = vector.broadcast %88 : vector<2x8x1xf32> to vector<2x8x8xf32>
    %90 = arith.mulf %85, %89 : vector<2x8x8xf32>
    %91 = vector.extract_strided_slice %37 {offsets = [0, 0, 16], sizes = [2, 8, 8], strides = [1, 1, 1]} : vector<2x8x32xf32> to vector<2x8x8xf32>
    "tpu.trace_start"() <{level = 10 : i32, message = "bqk,bkd->bqd"}> : () -> ()
    %cst_32 = arith.constant dense<0.000000e+00> : vector<2x8x8xf32>
    %92 = tpu.matmul %90, %91, %cst_32 {dimension_numbers = #tpu.dot_dimension_numbers<[2], [1], [1], [2], [0, 0, 0, 1, 1, 2], [0], [0]>} : vector<2x8x8xf32>, vector<2x8x8xf32>, vector<2x8x8xf32> -> vector<2x8x8xf32>
    "tpu.trace_stop"() : () -> ()
    %93 = vector.shape_cast %92 : vector<2x8x8xf32> to vector<16x8xf32>
    %94 = vector.extract_strided_slice %38 {offsets = [16, 0], sizes = [8, 32], strides = [1, 1]} : vector<32x32xf32> to vector<8x32xf32>
    %cst_33 = arith.constant dense<0.000000e+00> : vector<16x32xf32>
    %95 = tpu.matmul %93, %94, %cst_33 {dimension_numbers = #tpu.dot_dimension_numbers<[1], [0], [0], [1], [0, 0, 1, 1], [], []>} : vector<16x8xf32>, vector<8x32xf32>, vector<16x32xf32> -> vector<16x32xf32>
    %96 = arith.addf %77, %95 : vector<16x32xf32>
    %97 = vector.extract_strided_slice %33 {offsets = [0, 0, 24], sizes = [2, 8, 8], strides = [1, 1, 1]} : vector<2x8x32xf32> to vector<2x8x8xf32>
    %98 = vector.extract_strided_slice %35 {offsets = [0, 0, 24], sizes = [2, 8, 8], strides = [1, 1, 1]} : vector<2x8x32xf32> to vector<2x8x8xf32>
    "tpu.trace_start"() <{level = 10 : i32, message = "bqd,bkd->bqk"}> : () -> ()
    %cst_34 = arith.constant dense<0.000000e+00> : vector<2x8x8xf32>
    %99 = tpu.matmul %97, %98, %cst_34 {dimension_numbers = #tpu.dot_dimension_numbers<[2], [2], [1], [1], [0, 0, 0, 1, 1, 1], [0], [0]>} : vector<2x8x8xf32>, vector<2x8x8xf32>, vector<2x8x8xf32> -> vector<2x8x8xf32>
    "tpu.trace_stop"() : () -> ()
    %cst_35 = arith.constant dense<0xFF800000> : vector<2x8xf32>
    %100 = vector.multi_reduction <maximumf>, %99, %cst_35 [2] : vector<2x8x8xf32> to vector<2x8xf32>
    %101 = vector.shape_cast %100 : vector<2x8xf32> to vector<2x8x1xf32>
    %102 = vector.broadcast %101 : vector<2x8x1xf32> to vector<2x8x8xf32>
    %103 = arith.subf %99, %102 : vector<2x8x8xf32>
    %104 = math.exp %103 : vector<2x8x8xf32>
    %cst_36 = arith.constant dense<0.000000e+00> : vector<2x8xf32>
    %105 = vector.multi_reduction <add>, %104, %cst_36 [2] : vector<2x8x8xf32> to vector<2x8xf32>
    %106 = vector.shape_cast %105 : vector<2x8xf32> to vector<2x8x1xf32>
    %107 = tpu.reciprocal %106 {approx = true} : vector<2x8x1xf32> -> vector<2x8x1xf32>
    %108 = vector.broadcast %107 : vector<2x8x1xf32> to vector<2x8x8xf32>
    %109 = arith.mulf %104, %108 : vector<2x8x8xf32>
    %110 = vector.extract_strided_slice %37 {offsets = [0, 0, 24], sizes = [2, 8, 8], strides = [1, 1, 1]} : vector<2x8x32xf32> to vector<2x8x8xf32>
    "tpu.trace_start"() <{level = 10 : i32, message = "bqk,bkd->bqd"}> : () -> ()
    %cst_37 = arith.constant dense<0.000000e+00> : vector<2x8x8xf32>
    %111 = tpu.matmul %109, %110, %cst_37 {dimension_numbers = #tpu.dot_dimension_numbers<[2], [1], [1], [2], [0, 0, 0, 1, 1, 2], [0], [0]>} : vector<2x8x8xf32>, vector<2x8x8xf32>, vector<2x8x8xf32> -> vector<2x8x8xf32>
    "tpu.trace_stop"() : () -> ()
    %112 = vector.shape_cast %111 : vector<2x8x8xf32> to vector<16x8xf32>
    %113 = vector.extract_strided_slice %38 {offsets = [24, 0], sizes = [8, 32], strides = [1, 1]} : vector<32x32xf32> to vector<8x32xf32>
    %cst_38 = arith.constant dense<0.000000e+00> : vector<16x32xf32>
    %114 = tpu.matmul %112, %113, %cst_38 {dimension_numbers = #tpu.dot_dimension_numbers<[1], [0], [0], [1], [0, 0, 1, 1], [], []>} : vector<16x8xf32>, vector<8x32xf32>, vector<16x32xf32> -> vector<16x32xf32>
    %115 = arith.addf %96, %114 : vector<16x32xf32>
    %116 = arith.addf %1, %115 : vector<16x32xf32>
    %c0_39 = arith.constant 0 : index
    %c0_40 = arith.constant 0 : index
    %117 = vector.load %arg7[%c0_39, %c0_40] : memref<1x32xf32, #tpu.memory_space<vmem>>, vector<1x32xf32>
    %118 = vector.broadcast %117 : vector<1x32xf32> to vector<16x32xf32>
    %119 = arith.addf %116, %118 : vector<16x32xf32>
    %c0_41 = arith.constant 0 : index
    %c0_42 = arith.constant 0 : index
    %120 = vector.load %arg8[%c0_41, %c0_42] : memref<1x32xf32, #tpu.memory_space<vmem>>, vector<1x32xf32>
    %c0_43 = arith.constant 0 : index
    %c0_44 = arith.constant 0 : index
    %121 = vector.load %arg9[%c0_43, %c0_44] : memref<1x32xf32, #tpu.memory_space<vmem>>, vector<1x32xf32>
    %cst_45 = arith.constant dense<0.000000e+00> : vector<16xf32>
    %122 = vector.multi_reduction <add>, %119, %cst_45 [1] : vector<16x32xf32> to vector<16xf32>
    %123 = vector.shape_cast %122 : vector<16xf32> to vector<16x1xf32>
    %cst_46 = arith.constant 3.125000e-02 : f32
    %124 = vector.broadcast %cst_46 : f32 to vector<16x1xf32>
    %125 = arith.mulf %123, %124 : vector<16x1xf32>
    %126 = vector.broadcast %125 : vector<16x1xf32> to vector<16x32xf32>
    %127 = arith.subf %119, %126 : vector<16x32xf32>
    %128 = arith.mulf %127, %127 : vector<16x32xf32>
    %cst_47 = arith.constant dense<0.000000e+00> : vector<16xf32>
    %129 = vector.multi_reduction <add>, %128, %cst_47 [1] : vector<16x32xf32> to vector<16xf32>
    %130 = vector.shape_cast %129 : vector<16xf32> to vector<16x1xf32>
    %cst_48 = arith.constant 0.0322580636 : f32
    %131 = vector.broadcast %cst_48 : f32 to vector<16x1xf32>
    %132 = arith.mulf %130, %131 : vector<16x1xf32>
    %133 = math.sqrt %132 : vector<16x1xf32>
    %cst_49 = arith.constant 9.99999997E-7 : f32
    %134 = vector.broadcast %cst_49 : f32 to vector<16x1xf32>
    %135 = arith.addf %133, %134 : vector<16x1xf32>
    %136 = tpu.reciprocal %135 {approx = true} : vector<16x1xf32> -> vector<16x1xf32>
    %137 = vector.broadcast %120 : vector<1x32xf32> to vector<16x32xf32>
    %138 = arith.mulf %137, %127 : vector<16x32xf32>
    %139 = vector.broadcast %136 : vector<16x1xf32> to vector<16x32xf32>
    %140 = arith.mulf %138, %139 : vector<16x32xf32>
    %141 = vector.broadcast %121 : vector<1x32xf32> to vector<16x32xf32>
    %142 = arith.addf %140, %141 : vector<16x32xf32>
    %c0_50 = arith.constant 0 : index
    %c0_51 = arith.constant 0 : index
    %143 = vector.load %arg10[%c0_50, %c0_51] : memref<32x128xf32, #tpu.memory_space<vmem>>, vector<32x128xf32>
    %cst_52 = arith.constant dense<0.000000e+00> : vector<16x128xf32>
    %144 = tpu.matmul %142, %143, %cst_52 {dimension_numbers = #tpu.dot_dimension_numbers<[1], [0], [0], [1], [0, 0, 1, 1], [], []>} : vector<16x32xf32>, vector<32x128xf32>, vector<16x128xf32> -> vector<16x128xf32>
    %c0_53 = arith.constant 0 : index
    %c0_54 = arith.constant 0 : index
    %145 = vector.load %arg11[%c0_53, %c0_54] : memref<1x128xf32, #tpu.memory_space<vmem>>, vector<1x128xf32>
    %146 = vector.broadcast %145 : vector<1x128xf32> to vector<16x128xf32>
    %147 = arith.addf %144, %146 : vector<16x128xf32>
    %c0_55 = arith.constant 0 : index
    %c0_56 = arith.constant 0 : index
    %148 = vector.load %arg12[%c0_55, %c0_56] : memref<1x128xf32, #tpu.memory_space<vmem>>, vector<1x128xf32>
    %c0_57 = arith.constant 0 : index
    %c0_58 = arith.constant 0 : index
    %149 = vector.load %arg13[%c0_57, %c0_58] : memref<1x128xf32, #tpu.memory_space<vmem>>, vector<1x128xf32>
    %cst_59 = arith.constant dense<0.000000e+00> : vector<16xf32>
    %150 = vector.multi_reduction <add>, %147, %cst_59 [1] : vector<16x128xf32> to vector<16xf32>
    %151 = vector.shape_cast %150 : vector<16xf32> to vector<16x1xf32>
    %cst_60 = arith.constant 7.812500e-03 : f32
    %152 = vector.broadcast %cst_60 : f32 to vector<16x1xf32>
    %153 = arith.mulf %151, %152 : vector<16x1xf32>
    %154 = vector.broadcast %153 : vector<16x1xf32> to vector<16x128xf32>
    %155 = arith.subf %147, %154 : vector<16x128xf32>
    %156 = arith.mulf %155, %155 : vector<16x128xf32>
    %cst_61 = arith.constant dense<0.000000e+00> : vector<16xf32>
    %157 = vector.multi_reduction <add>, %156, %cst_61 [1] : vector<16x128xf32> to vector<16xf32>
    %158 = vector.shape_cast %157 : vector<16xf32> to vector<16x1xf32>
    %cst_62 = arith.constant 0.00787401571 : f32
    %159 = vector.broadcast %cst_62 : f32 to vector<16x1xf32>
    %160 = arith.mulf %158, %159 : vector<16x1xf32>
    %161 = math.sqrt %160 : vector<16x1xf32>
    %cst_63 = arith.constant 9.99999997E-7 : f32
    %162 = vector.broadcast %cst_63 : f32 to vector<16x1xf32>
    %163 = arith.addf %161, %162 : vector<16x1xf32>
    %164 = tpu.reciprocal %163 {approx = true} : vector<16x1xf32> -> vector<16x1xf32>
    %165 = vector.broadcast %148 : vector<1x128xf32> to vector<16x128xf32>
    %166 = arith.mulf %165, %155 : vector<16x128xf32>
    %167 = vector.broadcast %164 : vector<16x1xf32> to vector<16x128xf32>
    %168 = arith.mulf %166, %167 : vector<16x128xf32>
    %169 = vector.broadcast %149 : vector<1x128xf32> to vector<16x128xf32>
    %170 = arith.addf %168, %169 : vector<16x128xf32>
    %c0_64 = arith.constant 0 : index
    %c0_65 = arith.constant 0 : index
    %171 = vector.load %arg14[%c0_64, %c0_65] : memref<128x32xf32, #tpu.memory_space<vmem>>, vector<128x32xf32>
    %cst_66 = arith.constant dense<0.000000e+00> : vector<16x32xf32>
    %172 = tpu.matmul %170, %171, %cst_66 {dimension_numbers = #tpu.dot_dimension_numbers<[1], [0], [0], [1], [0, 0, 1, 1], [], []>} : vector<16x128xf32>, vector<128x32xf32>, vector<16x32xf32> -> vector<16x32xf32>
    %c0_67 = arith.constant 0 : index
    %c0_68 = arith.constant 0 : index
    %173 = vector.load %arg15[%c0_67, %c0_68] : memref<1x32xf32, #tpu.memory_space<vmem>>, vector<1x32xf32>
    %174 = vector.broadcast %173 : vector<1x32xf32> to vector<16x32xf32>
    %175 = arith.addf %172, %174 : vector<16x32xf32>
    %c0_69 = arith.constant 0 : index
    %c0_70 = arith.constant 0 : index
    %176 = vector.load %arg16[%c0_69, %c0_70] : memref<1x32xf32, #tpu.memory_space<vmem>>, vector<1x32xf32>
    %c0_71 = arith.constant 0 : index
    %c0_72 = arith.constant 0 : index
    %177 = vector.load %arg17[%c0_71, %c0_72] : memref<1x32xf32, #tpu.memory_space<vmem>>, vector<1x32xf32>
    %cst_73 = arith.constant dense<0.000000e+00> : vector<16xf32>
    %178 = vector.multi_reduction <add>, %175, %cst_73 [1] : vector<16x32xf32> to vector<16xf32>
    %179 = vector.shape_cast %178 : vector<16xf32> to vector<16x1xf32>
    %cst_74 = arith.constant 3.125000e-02 : f32
    %180 = vector.broadcast %cst_74 : f32 to vector<16x1xf32>
    %181 = arith.mulf %179, %180 : vector<16x1xf32>
    %182 = vector.broadcast %181 : vector<16x1xf32> to vector<16x32xf32>
    %183 = arith.subf %175, %182 : vector<16x32xf32>
    %184 = arith.mulf %183, %183 : vector<16x32xf32>
    %cst_75 = arith.constant dense<0.000000e+00> : vector<16xf32>
    %185 = vector.multi_reduction <add>, %184, %cst_75 [1] : vector<16x32xf32> to vector<16xf32>
    %186 = vector.shape_cast %185 : vector<16xf32> to vector<16x1xf32>
    %cst_76 = arith.constant 0.0322580636 : f32
    %187 = vector.broadcast %cst_76 : f32 to vector<16x1xf32>
    %188 = arith.mulf %186, %187 : vector<16x1xf32>
    %189 = math.sqrt %188 : vector<16x1xf32>
    %cst_77 = arith.constant 9.99999997E-7 : f32
    %190 = vector.broadcast %cst_77 : f32 to vector<16x1xf32>
    %191 = arith.addf %189, %190 : vector<16x1xf32>
    %192 = tpu.reciprocal %191 {approx = true} : vector<16x1xf32> -> vector<16x1xf32>
    %193 = vector.broadcast %176 : vector<1x32xf32> to vector<16x32xf32>
    %194 = arith.mulf %193, %183 : vector<16x32xf32>
    %195 = vector.broadcast %192 : vector<16x1xf32> to vector<16x32xf32>
    %196 = arith.mulf %194, %195 : vector<16x32xf32>
    %197 = vector.broadcast %177 : vector<1x32xf32> to vector<16x32xf32>
    %198 = arith.addf %196, %197 : vector<16x32xf32>
    %c0_78 = arith.constant 0 : index
    %c0_79 = arith.constant 0 : index
    %199 = vector.load %arg18[%c0_78, %c0_79] : memref<32x128xf32, #tpu.memory_space<vmem>>, vector<32x128xf32>
    %cst_80 = arith.constant dense<0.000000e+00> : vector<16x128xf32>
    %200 = tpu.matmul %198, %199, %cst_80 {dimension_numbers = #tpu.dot_dimension_numbers<[1], [0], [0], [1], [0, 0, 1, 1], [], []>} : vector<16x32xf32>, vector<32x128xf32>, vector<16x128xf32> -> vector<16x128xf32>
    %c0_81 = arith.constant 0 : index
    %c0_82 = arith.constant 0 : index
    %201 = vector.load %arg19[%c0_81, %c0_82] : memref<1x128xf32, #tpu.memory_space<vmem>>, vector<1x128xf32>
    %202 = vector.broadcast %201 : vector<1x128xf32> to vector<16x128xf32>
    %203 = arith.addf %200, %202 : vector<16x128xf32>
    %cst_83 = arith.constant 0.000000e+00 : f32
    %204 = vector.broadcast %cst_83 : f32 to vector<16x128xf32>
    %205 = arith.maximumf %203, %204 : vector<16x128xf32>
    %206 = vector.shape_cast %205 : vector<16x128xf32> to vector<2x8x128xf32>
    %c0_84 = arith.constant 0 : index
    %c0_85 = arith.constant 0 : index
    %c0_86 = arith.constant 0 : index
    %207 = vector.load %arg20[%c0_84, %c0_85, %c0_86] : memref<2x8x128xf32, #tpu.memory_space<vmem>>, vector<2x8x128xf32>
    tpu.vector_store %arg20[%c0_84, %c0_85, %c0_86], %206 {strides = array<i32>} : memref<2x8x128xf32, #tpu.memory_space<vmem>>, vector<2x8x128xf32>,
    return
  }
  func.func @transform_0(%arg0: i32) -> (i32, i32, i32) {
    %c0_i32 = arith.constant 0 : i32
    %c0_i32_0 = arith.constant 0 : i32
    %c0_i32_1 = arith.constant 0 : i32
    return %arg0, %c0_i32, %c0_i32_0 : i32, i32, i32
  }
  func.func @transform_1(%arg0: i32) -> (i32, i32) {
    %c0_i32 = arith.constant 0 : i32
    %c0_i32_0 = arith.constant 0 : i32
    %c0_i32_1 = arith.constant 0 : i32
    return %c0_i32, %c0_i32_0 : i32, i32
  }
  func.func @transform_2(%arg0: i32) -> (i32, i32) {
    %c0_i32 = arith.constant 0 : i32
    %c0_i32_0 = arith.constant 0 : i32
    %c0_i32_1 = arith.constant 0 : i32
    return %c0_i32, %c0_i32_0 : i32, i32
  }
  func.func @transform_3(%arg0: i32) -> (i32, i32) {
    %c0_i32 = arith.constant 0 : i32
    %c0_i32_0 = arith.constant 0 : i32
    %c0_i32_1 = arith.constant 0 : i32
    return %c0_i32, %c0_i32_0 : i32, i32
  }
  func.func @transform_4(%arg0: i32) -> (i32, i32) {
    %c0_i32 = arith.constant 0 : i32
    %c0_i32_0 = arith.constant 0 : i32
    %c0_i32_1 = arith.constant 0 : i32
    return %c0_i32, %c0_i32_0 : i32, i32
  }
  func.func @transform_5(%arg0: i32) -> (i32, i32) {
    %c0_i32 = arith.constant 0 : i32
    %c0_i32_0 = arith.constant 0 : i32
    %c0_i32_1 = arith.constant 0 : i32
    return %c0_i32, %c0_i32_0 : i32, i32
  }
  func.func @transform_6(%arg0: i32) -> (i32, i32) {
    %c0_i32 = arith.constant 0 : i32
    %c0_i32_0 = arith.constant 0 : i32
    %c0_i32_1 = arith.constant 0 : i32
    return %c0_i32, %c0_i32_0 : i32, i32
  }
  func.func @transform_7(%arg0: i32) -> (i32, i32) {
    %c0_i32 = arith.constant 0 : i32
    %c0_i32_0 = arith.constant 0 : i32
    %c0_i32_1 = arith.constant 0 : i32
    return %c0_i32, %c0_i32_0 : i32, i32
  }
  func.func @transform_8(%arg0: i32) -> (i32, i32) {
    %c0_i32 = arith.constant 0 : i32
    %c0_i32_0 = arith.constant 0 : i32
    %c0_i32_1 = arith.constant 0 : i32
    return %c0_i32, %c0_i32_0 : i32, i32
  }
  func.func @transform_9(%arg0: i32) -> (i32, i32) {
    %c0_i32 = arith.constant 0 : i32
    %c0_i32_0 = arith.constant 0 : i32
    %c0_i32_1 = arith.constant 0 : i32
    return %c0_i32, %c0_i32_0 : i32, i32
  }
  func.func @transform_10(%arg0: i32) -> (i32, i32) {
    %c0_i32 = arith.constant 0 : i32
    %c0_i32_0 = arith.constant 0 : i32
    %c0_i32_1 = arith.constant 0 : i32
    return %c0_i32, %c0_i32_0 : i32, i32
  }
  func.func @transform_11(%arg0: i32) -> (i32, i32) {
    %c0_i32 = arith.constant 0 : i32
    %c0_i32_0 = arith.constant 0 : i32
    %c0_i32_1 = arith.constant 0 : i32
    return %c0_i32, %c0_i32_0 : i32, i32
  }
  func.func @transform_12(%arg0: i32) -> (i32, i32) {
    %c0_i32 = arith.constant 0 : i32
    %c0_i32_0 = arith.constant 0 : i32
    %c0_i32_1 = arith.constant 0 : i32
    return %c0_i32, %c0_i32_0 : i32, i32
  }
  func.func @transform_13(%arg0: i32) -> (i32, i32) {
    %c0_i32 = arith.constant 0 : i32
    %c0_i32_0 = arith.constant 0 : i32
    %c0_i32_1 = arith.constant 0 : i32
    return %c0_i32, %c0_i32_0 : i32, i32
  }
  func.func @transform_14(%arg0: i32) -> (i32, i32) {
    %c0_i32 = arith.constant 0 : i32
    %c0_i32_0 = arith.constant 0 : i32
    %c0_i32_1 = arith.constant 0 : i32
    return %c0_i32, %c0_i32_0 : i32, i32
  }
  func.func @transform_15(%arg0: i32) -> (i32, i32) {
    %c0_i32 = arith.constant 0 : i32
    %c0_i32_0 = arith.constant 0 : i32
    %c0_i32_1 = arith.constant 0 : i32
    return %c0_i32, %c0_i32_0 : i32, i32
  }
  func.func @transform_16(%arg0: i32) -> (i32, i32) {
    %c0_i32 = arith.constant 0 : i32
    %c0_i32_0 = arith.constant 0 : i32
    %c0_i32_1 = arith.constant 0 : i32
    return %c0_i32, %c0_i32_0 : i32, i32
  }
  func.func @transform_17(%arg0: i32) -> (i32, i32) {
    %c0_i32 = arith.constant 0 : i32
    %c0_i32_0 = arith.constant 0 : i32
    %c0_i32_1 = arith.constant 0 : i32
    return %c0_i32, %c0_i32_0 : i32, i32
  }
  func.func @transform_18(%arg0: i32) -> (i32, i32) {
    %c0_i32 = arith.constant 0 : i32
    %c0_i32_0 = arith.constant 0 : i32
    %c0_i32_1 = arith.constant 0 : i32
    return %c0_i32, %c0_i32_0 : i32, i32
  }
  func.func @transform_19(%arg0: i32) -> (i32, i32, i32) {
    %c0_i32 = arith.constant 0 : i32
    %c0_i32_0 = arith.constant 0 : i32
    %c0_i32_1 = arith.constant 0 : i32
    return %arg0, %c0_i32, %c0_i32_0 : i32, i32, i32
  }
}

</mosaic_0001>

<llo_original>
// kernel: tpu_custom_call.1
$region0: #{tpu_custom_call.1}
  #allocation0 [shape = 'u32[]', space=smem, size = 0x4, offset = 0x4, fixed_abs, tag = 'smem constant byte address 0x4 - core index']
  #allocation1 [shape = 'u32[144,128]{1,0:T(1,128)}', space=vmem, size = 0x12000, scoped, tag = 'internal scratch']
  %s0 = inlined_call_operand.vmem [shape: f32[2,8,32], index: 0, kind: input, shape index: {}]
  %s1 = inlined_call_operand.vmem [shape: f32[1,32], index: 1, kind: input, shape index: {}]
  %s2 = inlined_call_operand.vmem [shape: f32[1,32], index: 2, kind: input, shape index: {}]
  %s3 = inlined_call_operand.vmem [shape: f32[32,96], index: 3, kind: input, shape index: {}]
  %s4 = inlined_call_operand.vmem [shape: f32[1,96], index: 4, kind: input, shape index: {}]
  %s5 = inlined_call_operand.vmem [shape: f32[32,32], index: 5, kind: input, shape index: {}]
  %s6 = inlined_call_operand.vmem [shape: f32[1,32], index: 6, kind: input, shape index: {}]
  %s7 = inlined_call_operand.vmem [shape: f32[1,32], index: 7, kind: input, shape index: {}]
  %s8 = inlined_call_operand.vmem [shape: f32[1,32], index: 8, kind: input, shape index: {}]
  %s9 = inlined_call_operand.vmem [shape: f32[32,128], index: 9, kind: input, shape index: {}]
  %s10 = inlined_call_operand.vmem [shape: f32[1,128], index: 10, kind: input, shape index: {}]
  %s11 = inlined_call_operand.vmem [shape: f32[1,128], index: 11, kind: input, shape index: {}]
  %s12 = inlined_call_operand.vmem [shape: f32[1,128], index: 12, kind: input, shape index: {}]
  %s13 = inlined_call_operand.vmem [shape: f32[128,32], index: 13, kind: input, shape index: {}]
  %s14 = inlined_call_operand.vmem [shape: f32[1,32], index: 14, kind: input, shape index: {}]
  %s15 = inlined_call_operand.vmem [shape: f32[1,32], index: 15, kind: input, shape index: {}]
  %s16 = inlined_call_operand.vmem [shape: f32[1,32], index: 16, kind: input, shape index: {}]
  %s17 = inlined_call_operand.vmem [shape: f32[32,128], index: 17, kind: input, shape index: {}]
  %s18 = inlined_call_operand.vmem [shape: f32[1,128], index: 18, kind: input, shape index: {}]
  %s19 = inlined_call_operand.hbm [shape: f32[2,8,128], index: 19, kind: output, shape index: {}]
  %s20 = sld [smem:[#allocation0]]
  $region86: #{tpu_custom_call.1} parent=0
    _
  %s22 = ssub.s32 1, %s20
  %s23 = scalar_select 0, %s22, %s20
  $region1: #{tpu_custom_call.1} parent=0
    #allocation2 [shape = 'u8[8192]{0}', space=vmem, size = 0x2000, scoped, tag = 'output window, operand 0, single buffered']
    #allocation3 [shape = 's32[1]{0}', space=sflag, size = 0x4, scoped, tag = 'scoped memory for tpu_custom_call.1']
    %24 = vsyncpa [#allocation3], 0
    // Predicated region
    $region2: #{tpu_custom_call.1} parent=1 // pred_check
      _
    $region3: #{tpu_custom_call.1} parent=1 // pred_check_branch
      %26 = sbr.rel (0) target = $region5
    $region4: #{tpu_custom_call.1} parent=1 // pred_region
      _
    $region5: #{tpu_custom_call.1} parent=1 // pred_fallthru
      _
    // Predicated region
    $region6: #{tpu_custom_call.1} parent=1 // pred_check
      _
    $region7: #{tpu_custom_call.1} parent=1 // pred_check_branch
      %28 = sbr.rel (0) target = $region9
    $region8: #{tpu_custom_call.1} parent=1 // pred_region
      _
    $region9: #{tpu_custom_call.1} parent=1 // pred_fallthru
      _
    // Predicated region
    $region10: #{tpu_custom_call.1} parent=1 // pred_check
      _
    $region11: #{tpu_custom_call.1} parent=1 // pred_check_branch
      %30 = sbr.rel (0) target = $region13
    $region12: #{tpu_custom_call.1} parent=1 // pred_region
      _
    $region13: #{tpu_custom_call.1} parent=1 // pred_fallthru
      _
    // Predicated region
    $region14: #{tpu_custom_call.1} parent=1 // pred_check
      _
    $region15: #{tpu_custom_call.1} parent=1 // pred_check_branch
      %32 = sbr.rel (0) target = $region17
    $region16: #{tpu_custom_call.1} parent=1 // pred_region
      _
    $region17: #{tpu_custom_call.1} parent=1 // pred_fallthru
      _
    // Predicated region
    $region18: #{tpu_custom_call.1} parent=1 // pred_check
      _
    $region19: #{tpu_custom_call.1} parent=1 // pred_check_branch
      %34 = sbr.rel (0) target = $region21
    $region20: #{tpu_custom_call.1} parent=1 // pred_region
      _
    $region21: #{tpu_custom_call.1} parent=1 // pred_fallthru
      _
    // Predicated region
    $region22: #{tpu_custom_call.1} parent=1 // pred_check
      _
    $region23: #{tpu_custom_call.1} parent=1 // pred_check_branch
      %36 = sbr.rel (0) target = $region25
    $region24: #{tpu_custom_call.1} parent=1 // pred_region
      _
    $region25: #{tpu_custom_call.1} parent=1 // pred_fallthru
      _
    // Predicated region
    $region26: #{tpu_custom_call.1} parent=1 // pred_check
      _
    $region27: #{tpu_custom_call.1} parent=1 // pred_check_branch
      %38 = sbr.rel (0) target = $region29
    $region28: #{tpu_custom_call.1} parent=1 // pred_region
      _
    $region29: #{tpu_custom_call.1} parent=1 // pred_fallthru
      _
    // Predicated region
    $region30: #{tpu_custom_call.1} parent=1 // pred_check
      _
    $region31: #{tpu_custom_call.1} parent=1 // pred_check_branch
      %40 = sbr.rel (0) target = $region33
    $region32: #{tpu_custom_call.1} parent=1 // pred_region
      _
    $region33: #{tpu_custom_call.1} parent=1 // pred_fallthru
      _
    // Predicated region
    $region34: #{tpu_custom_call.1} parent=1 // pred_check
      _
    $region35: #{tpu_custom_call.1} parent=1 // pred_check_branch
      %42 = sbr.rel (0) target = $region37
    $region36: #{tpu_custom_call.1} parent=1 // pred_region
      _
    $region37: #{tpu_custom_call.1} parent=1 // pred_fallthru
      _
    // Predicated region
    $region38: #{tpu_custom_call.1} parent=1 // pred_check
      _
    $region39: #{tpu_custom_call.1} parent=1 // pred_check_branch
      %44 = sbr.rel (0) target = $region41
    $region40: #{tpu_custom_call.1} parent=1 // pred_region
      _
    $region41: #{tpu_custom_call.1} parent=1 // pred_fallthru
      _
    // Predicated region
    $region42: #{tpu_custom_call.1} parent=1 // pred_check
      _
    $region43: #{tpu_custom_call.1} parent=1 // pred_check_branch
      %46 = sbr.rel (0) target = $region45
    $region44: #{tpu_custom_call.1} parent=1 // pred_region
      _
    $region45: #{tpu_custom_call.1} parent=1 // pred_fallthru
      _
    // Predicated region
    $region46: #{tpu_custom_call.1} parent=1 // pred_check
      _
    $region47: #{tpu_custom_call.1} parent=1 // pred_check_branch
      %48 = sbr.rel (0) target = $region49
    $region48: #{tpu_custom_call.1} parent=1 // pred_region
      _
    $region49: #{tpu_custom_call.1} parent=1 // pred_fallthru
      _
    // Predicated region
    $region50: #{tpu_custom_call.1} parent=1 // pred_check
      _
    $region51: #{tpu_custom_call.1} parent=1 // pred_check_branch
      %50 = sbr.rel (0) target = $region53
    $region52: #{tpu_custom_call.1} parent=1 // pred_region
      _
    $region53: #{tpu_custom_call.1} parent=1 // pred_fallthru
      _
    // Predicated region
    $region54: #{tpu_custom_call.1} parent=1 // pred_check
      _
    $region55: #{tpu_custom_call.1} parent=1 // pred_check_branch
      %52 = sbr.rel (0) target = $region57
    $region56: #{tpu_custom_call.1} parent=1 // pred_region
      _
    $region57: #{tpu_custom_call.1} parent=1 // pred_fallthru
      _
    // Predicated region
    $region58: #{tpu_custom_call.1} parent=1 // pred_check
      _
    $region59: #{tpu_custom_call.1} parent=1 // pred_check_branch
      %54 = sbr.rel (0) target = $region61
    $region60: #{tpu_custom_call.1} parent=1 // pred_region
      _
    $region61: #{tpu_custom_call.1} parent=1 // pred_fallthru
      _
    // Predicated region
    $region62: #{tpu_custom_call.1} parent=1 // pred_check
      _
    $region63: #{tpu_custom_call.1} parent=1 // pred_check_branch
      %56 = sbr.rel (0) target = $region65
    $region64: #{tpu_custom_call.1} parent=1 // pred_region
      _
    $region65: #{tpu_custom_call.1} parent=1 // pred_fallthru
      _
    // Predicated region
    $region66: #{tpu_custom_call.1} parent=1 // pred_check
      _
    $region67: #{tpu_custom_call.1} parent=1 // pred_check_branch
      %58 = sbr.rel (0) target = $region69
    $region68: #{tpu_custom_call.1} parent=1 // pred_region
      _
    $region69: #{tpu_custom_call.1} parent=1 // pred_fallthru
      _
    // Predicated region
    $region70: #{tpu_custom_call.1} parent=1 // pred_check
      _
    $region71: #{tpu_custom_call.1} parent=1 // pred_check_branch
      %60 = sbr.rel (0) target = $region73
    $region72: #{tpu_custom_call.1} parent=1 // pred_region
      _
    $region73: #{tpu_custom_call.1} parent=1 // pred_fallthru
      _
    // Predicated region
    $region74: #{tpu_custom_call.1} parent=1 // pred_check
      _
    $region75: #{tpu_custom_call.1} parent=1 // pred_check_branch
      %62 = sbr.rel (0) target = $region77
    $region76: #{tpu_custom_call.1} parent=1 // pred_region
      _
    $region77: #{tpu_custom_call.1} parent=1 // pred_fallthru
      _
    %v63 = vld [vmem:[%s0] sm:$0xff]
    %v64 = vld [vmem:[%s0 + $0x8] sm:$0xff]
    %v65 = vld [vmem:[%s1] sm:$0x1]
    %v66 = vld [vmem:[%s2] sm:$0x1]
    %vm67 = vcmask 261120
    %v68 = vsel %vm67, %v63, 0.0
    %69 = vadd.xlane.f32.xlu0 %v68
    %v70 = vpop.xlane.xlu0 %69
    %v71 = vsel %vm67, %v64, 0.0
    %72 = vadd.xlane.f32.xlu0 %v71
    %v73 = vpop.xlane.xlu0 %72
    %v74 = vmul.f32 %v70, 0.03125
    %v75 = vmul.f32 %v73, 0.03125
    %v76 = vsub.f32 %v63, %v74
    %v77 = vsub.f32 %v64, %v75
    %v78 = vmul.f32 %v76, %v76
    %v79 = vmul.f32 %v77, %v77
    %v80 = vsel %vm67, %v78, 0.0
    %81 = vadd.xlane.f32.xlu0 %v80
    %v82 = vpop.xlane.xlu0 %81
    %v83 = vsel %vm67, %v79, 0.0
    %84 = vadd.xlane.f32.xlu0 %v83
    %v85 = vpop.xlane.xlu0 %84
    %v86 = vmul.f32 %v82, 0.032258064
    %v87 = vmul.f32 %v85, 0.032258064
    %v88 = vrsqrt.pop %v86
    %v89 = vmul.f32 %v86, %v88
    %vm90 = vcmp.eq.f32.partialorder %v86, inf
    %v91 = vsel %vm90, %v86, %v89
    %vm92 = vcmp.eq.f32.partialorder %v86, 0.0
    %v93 = vand.u32 %v86, 2147483648
    %v94 = vsel %vm92, %v93, %v91
    %v95 = vrsqrt.pop %v87
    %v96 = vmul.f32 %v87, %v95
    %vm97 = vcmp.eq.f32.partialorder %v87, inf
    %v98 = vsel %vm97, %v87, %v96
    %vm99 = vcmp.eq.f32.partialorder %v87, 0.0
    %v100 = vand.u32 %v87, 2147483648
    %v101 = vsel %vm99, %v100, %v98
    %v102 = vadd.f32 %v94, 1e-06
    %v103 = vadd.f32 %v101, 1e-06
    %v104 = vrcp.pop %v102
    %v105 = vrcp.pop %v103
    %v107 = vlaneseq
    %v108 = vshrl.u32 %v107, 7
    %v109 = vsub.s32 0, %v108
    %v110 = vrot.slane %v65, %v109
    %v112 = vmul.f32 %v110, %v76
    %v113 = vmul.f32 %v110, %v77
    %v114 = vmul.f32 %v112, %v104
    %v115 = vmul.f32 %v113, %v105
    %v117 = vlaneseq
    %v118 = vshrl.u32 %v117, 7
    %v119 = vsub.s32 0, %v118
    %v120 = vrot.slane %v66, %v119
    %v122 = vadd.f32 %v114, %v120
    %v123 = vadd.f32 %v115, %v120
    %v124 = vld [vmem:[%s3] sm:$0xff]
    %v125 = vld [vmem:[%s3 + $0x8] sm:$0xff]
    %v126 = vld [vmem:[%s3 + $0x10] sm:$0xff]
    %v127 = vld [vmem:[%s3 + $0x18] sm:$0xff]
    %v128 = vld [vmem:[%s4] sm:$0x1]
    %v130 = vlaneseq
    %v131 = vshrl.u32 %v130, 7
    %v132 = vsub.s32 0, %v131
    %v133 = vrot.slane %v128, %v132
    %v136 = vsel %vm67, %v122, 0
    %v139 = vsel %vm67, %v123, 0
    %141 = vmatprep.subr.mxu0 0.0
    %142 = vmatpush1.msra.mxu0 %v124
    %143 = vmatprep.subr.mxu0 0.0
    %144 = vmatpush1.msra.mxu0 %v125
    %145 = vmatprep.subr.mxu0 0.0
    %146 = vmatpush1.msra.mxu0 %v126
    %147 = vmatprep.subr.mxu0 0.0
    %148 = vmatpush1.msra.mxu0 %v127
    %149 = vmatprep.subr.mxu0 0.0
    %150 = vmatpush1.msra.mxu0 0.0
    %151 = vmatprep.subr.mxu0 0.0
    %152 = vmatpush1.msra.mxu0 0.0
    %153 = vmatprep.subr.mxu0 0.0
    %154 = vmatpush1.msra.mxu0 0.0
    %155 = vmatprep.subr.mxu0 0.0
    %156 = vmatpush1.msra.mxu0 0.0
    %157 = vmatprep.subr.mxu0 0.0
    %158 = vmatpush1.msra.mxu0 0.0
    %159 = vmatprep.subr.mxu0 0.0
    %160 = vmatpush1.msra.mxu0 0.0
    %161 = vmatprep.subr.mxu0 0.0
    %162 = vmatpush1.msra.mxu0 0.0
    %163 = vmatprep.subr.mxu0 0.0
    %164 = vmatpush1.msra.mxu0 0.0
    %165 = vmatprep.subr.mxu0 0.0
    %166 = vmatpush1.msra.mxu0 0.0
    %167 = vmatprep.subr.mxu0 0.0
    %168 = vmatpush1.msra.mxu0 0.0
    %169 = vmatprep.subr.mxu0 0.0
    %170 = vmatpush1.msra.mxu0 0.0
    %171 = vmatprep.subr.mxu0 0.0
    %172 = vmatpush1.msra.mxu0 0.0
    %173 = vmatprep.subr.mxu0 0.0
    %174 = vmatpush1.msra.mxu0 0.0
    %175 = vmatprep.subr.mxu0 0.0
    %176 = vmatpush1.msra.mxu0 0.0
    %177 = vmatprep.subr.mxu0 0.0
    %178 = vmatpush1.msra.mxu0 0.0
    %179 = vmatprep.subr.mxu0 0.0
    %180 = vmatpush1.msra.mxu0 0.0
    %181 = vmatprep.subr.mxu0 0.0
    %182 = vmatpush1.msra.mxu0 0.0
    %183 = vmatprep.subr.mxu0 0.0
    %184 = vmatpush1.msra.mxu0 0.0
    %185 = vmatprep.subr.mxu0 0.0
    %186 = vmatpush1.msra.mxu0 0.0
    %187 = vmatprep.subr.mxu0 0.0
    %188 = vmatpush1.msra.mxu0 0.0
    %189 = vmatprep.subr.mxu0 0.0
    %190 = vmatpush1.msra.mxu0 0.0
    %191 = vmatprep.subr.mxu0 0.0
    %192 = vmatpush1.msra.mxu0 0.0
    %193 = vmatprep.subr.mxu0 0.0
    %194 = vmatpush1.msra.mxu0 0.0
    %195 = vmatprep.subr.mxu0 0.0
    %196 = vmatpush1.msra.mxu0 0.0
    %197 = vmatprep.subr.mxu0 0.0
    %198 = vmatpush1.msra.mxu0 0.0
    %199 = vmatprep.subr.mxu0 0.0
    %200 = vmatpush1.msra.mxu0 0.0
    %201 = vmatprep.subr.mxu0 0.0
    %202 = vmatpush1.msra.mxu0 0.0
    %203 = vmatprep.subr.mxu0 0.0
    %204 = vmatpush1.msra.mxu0 0.0
    %205 = vmatprep.mubr.f32.mxu0 0.0
    %206 = vmatmul.mubr.f32.gmra.mrb[0].mxu0 %v136
    %v207 = vpop.f32.mrb[0].mxu0
    %v208 = vadd.f32 %v133, %v207
    %v209 = vpop.f32.mrb[0].mxu0
    %210 = vmatprep.mubr.f32.mxu0 0.0
    %211 = vmatmul.mubr.f32.gmra.mrb[0].mxu0 %v139
    %v212 = vpop.f32.mrb[0].mxu0
    %v213 = vadd.f32 %v133, %v212
    %v214 = vpop.f32.mrb[0].mxu0
    %215 = vdwg.mxu0
    %v216 = vmul.f32 %v208, 0.35355338
    %v217 = vmul.f32 %v213, 0.35355338
    %v218 = vld [vmem:[%s5] sm:$0xff]
    %v219 = vld [vmem:[%s5 + $0x8] sm:$0xff]
    %v220 = vld [vmem:[%s5 + $0x10] sm:$0xff]
    %v221 = vld [vmem:[%s5 + $0x18] sm:$0xff]
    %223 = vrot.lane.b32.xlu0 %v208, 96
    %v224 = vpop.permute.xlu0 %223
    %vm225 = vcmask 64512
    %v227 = vsel %vm225, %v216, 0
    %v229 = vsel %vm225, %v224, 0
    %231 = vmatprep.subr.mxu0 0.0
    %232 = vmatpush1.xpose.msra.mxu0 %v229
    %233 = vmatprep.subr.mxu0 0.0
    %234 = vmatpush1.xpose.msra.mxu0 0.0
    %235 = vmatprep.subr.mxu0 0.0
    %236 = vmatpush1.xpose.msra.mxu0 0.0
    %237 = vmatprep.subr.mxu0 0.0
    %238 = vmatpush1.xpose.msra.mxu0 0.0
    %239 = vmatprep.subr.mxu0 0.0
    %240 = vmatpush1.xpose.msra.mxu0 0.0
    %241 = vmatprep.subr.mxu0 0.0
    %242 = vmatpush1.xpose.msra.mxu0 0.0
    %243 = vmatprep.subr.mxu0 0.0
    %244 = vmatpush1.xpose.msra.mxu0 0.0
    %245 = vmatprep.subr.mxu0 0.0
    %246 = vmatpush1.xpose.msra.mxu0 0.0
    %247 = vmatprep.subr.mxu0 0.0
    %248 = vmatpush1.xpose.msra.mxu0 0.0
    %249 = vmatprep.subr.mxu0 0.0
    %250 = vmatpush1.xpose.msra.mxu0 0.0
    %251 = vmatprep.subr.mxu0 0.0
    %252 = vmatpush1.xpose.msra.mxu0 0.0
    %253 = vmatprep.subr.mxu0 0.0
    %254 = vmatpush1.xpose.msra.mxu0 0.0
    %255 = vmatprep.subr.mxu0 0.0
    %256 = vmatpush1.xpose.msra.mxu0 0.0
    %257 = vmatprep.subr.mxu0 0.0
    %258 = vmatpush1.xpose.msra.mxu0 0.0
    %259 = vmatprep.subr.mxu0 0.0
    %260 = vmatpush1.xpose.msra.mxu0 0.0
    %261 = vmatprep.subr.mxu0 0.0
    %262 = vmatpush1.xpose.msra.mxu0 0.0
    %263 = vmatprep.subr.mxu0 0.0
    %264 = vmatpush1.xpose.msra.mxu0 0.0
    %265 = vmatprep.subr.mxu0 0.0
    %266 = vmatpush1.xpose.msra.mxu0 0.0
    %267 = vmatprep.subr.mxu0 0.0
    %268 = vmatpush1.xpose.msra.mxu0 0.0
    %269 = vmatprep.subr.mxu0 0.0
    %270 = vmatpush1.xpose.msra.mxu0 0.0
    %271 = vmatprep.subr.mxu0 0.0
    %272 = vmatpush1.xpose.msra.mxu0 0.0
    %273 = vmatprep.subr.mxu0 0.0
    %274 = vmatpush1.xpose.msra.mxu0 0.0
    %275 = vmatprep.subr.mxu0 0.0
    %276 = vmatpush1.xpose.msra.mxu0 0.0
    %277 = vmatprep.subr.mxu0 0.0
    %278 = vmatpush1.xpose.msra.mxu0 0.0
    %279 = vmatprep.subr.mxu0 0.0
    %280 = vmatpush1.xpose.msra.mxu0 0.0
    %281 = vmatprep.subr.mxu0 0.0
    %282 = vmatpush1.xpose.msra.mxu0 0.0
    %283 = vmatprep.subr.mxu0 0.0
    %284 = vmatpush1.xpose.msra.mxu0 0.0
    %285 = vmatprep.subr.mxu0 0.0
    %286 = vmatpush1.xpose.msra.mxu0 0.0
    %287 = vmatprep.subr.mxu0 0.0
    %288 = vmatpush1.xpose.msra.mxu0 0.0
    %289 = vmatprep.subr.mxu0 0.0
    %290 = vmatpush1.xpose.msra.mxu0 0.0
    %291 = vmatprep.subr.mxu0 0.0
    %292 = vmatpush1.xpose.msra.mxu0 0.0
    %293 = vmatprep.subr.mxu0 0.0
    %294 = vmatpush1.xpose.msra.mxu0 0.0
    %295 = vmatprep.mubr.f32.mxu0 0.0
    %296 = vmatmul.mubr.f32.gmra.mrb[0].mxu0 %v227
    %v297 = vpop.f32.mrb[0].mxu0
    %v298 = vadd.f32 0.0, %v297
    %v299 = vpop.f32.mrb[0].mxu0
    %300 = vdwg.mxu0
    %302 = vrot.lane.b32.xlu0 %v213, 96
    %v303 = vpop.permute.xlu0 %302
    %v305 = vsel %vm225, %v217, 0
    %v307 = vsel %vm225, %v303, 0
    %309 = vmatprep.subr.mxu0 0.0
    %310 = vmatpush1.xpose.msra.mxu0 %v307
    %311 = vmatprep.subr.mxu0 0.0
    %312 = vmatpush1.xpose.msra.mxu0 0.0
    %313 = vmatprep.subr.mxu0 0.0
    %314 = vmatpush1.xpose.msra.mxu0 0.0
    %315 = vmatprep.subr.mxu0 0.0
    %316 = vmatpush1.xpose.msra.mxu0 0.0
    %317 = vmatprep.subr.mxu0 0.0
    %318 = vmatpush1.xpose.msra.mxu0 0.0
    %319 = vmatprep.subr.mxu0 0.0
    %320 = vmatpush1.xpose.msra.mxu0 0.0
    %321 = vmatprep.subr.mxu0 0.0
    %322 = vmatpush1.xpose.msra.mxu0 0.0
    %323 = vmatprep.subr.mxu0 0.0
    %324 = vmatpush1.xpose.msra.mxu0 0.0
    %325 = vmatprep.subr.mxu0 0.0
    %326 = vmatpush1.xpose.msra.mxu0 0.0
    %327 = vmatprep.subr.mxu0 0.0
    %328 = vmatpush1.xpose.msra.mxu0 0.0
    %329 = vmatprep.subr.mxu0 0.0
    %330 = vmatpush1.xpose.msra.mxu0 0.0
    %331 = vmatprep.subr.mxu0 0.0
    %332 = vmatpush1.xpose.msra.mxu0 0.0
    %333 = vmatprep.subr.mxu0 0.0
    %334 = vmatpush1.xpose.msra.mxu0 0.0
    %335 = vmatprep.subr.mxu0 0.0
    %336 = vmatpush1.xpose.msra.mxu0 0.0
    %337 = vmatprep.subr.mxu0 0.0
    %338 = vmatpush1.xpose.msra.mxu0 0.0
    %339 = vmatprep.subr.mxu0 0.0
    %340 = vmatpush1.xpose.msra.mxu0 0.0
    %341 = vmatprep.subr.mxu0 0.0
    %342 = vmatpush1.xpose.msra.mxu0 0.0
    %343 = vmatprep.subr.mxu0 0.0
    %344 = vmatpush1.xpose.msra.mxu0 0.0
    %345 = vmatprep.subr.mxu0 0.0
    %346 = vmatpush1.xpose.msra.mxu0 0.0
    %347 = vmatprep.subr.mxu0 0.0
    %348 = vmatpush1.xpose.msra.mxu0 0.0
    %349 = vmatprep.subr.mxu0 0.0
    %350 = vmatpush1.xpose.msra.mxu0 0.0
    %351 = vmatprep.subr.mxu0 0.0
    %352 = vmatpush1.xpose.msra.mxu0 0.0
    %353 = vmatprep.subr.mxu0 0.0
    %354 = vmatpush1.xpose.msra.mxu0 0.0
    %355 = vmatprep.subr.mxu0 0.0
    %356 = vmatpush1.xpose.msra.mxu0 0.0
    %357 = vmatprep.subr.mxu0 0.0
    %358 = vmatpush1.xpose.msra.mxu0 0.0
    %359 = vmatprep.subr.mxu0 0.0
    %360 = vmatpush1.xpose.msra.mxu0 0.0
    %361 = vmatprep.subr.mxu0 0.0
    %362 = vmatpush1.xpose.msra.mxu0 0.0
    %363 = vmatprep.subr.mxu0 0.0
    %364 = vmatpush1.xpose.msra.mxu0 0.0
    %365 = vmatprep.subr.mxu0 0.0
    %366 = vmatpush1.xpose.msra.mxu0 0.0
    %367 = vmatprep.subr.mxu0 0.0
    %368 = vmatpush1.xpose.msra.mxu0 0.0
    %369 = vmatprep.subr.mxu0 0.0
    %370 = vmatpush1.xpose.msra.mxu0 0.0
    %371 = vmatprep.subr.mxu0 0.0
    %372 = vmatpush1.xpose.msra.mxu0 0.0
    %373 = vmatprep.mubr.f32.mxu0 0.0
    %374 = vmatmul.mubr.f32.gmra.mrb[0].mxu0 %v305
    %v375 = vpop.f32.mrb[0].mxu0
    %v376 = vadd.f32 0.0, %v375
    %v377 = vpop.f32.mrb[0].mxu0
    %378 = vdwg.mxu0
    %v379 = vsel %vm225, %v298, -inf
    %380 = vmax.xlane.f32.xlu0 %v379
    %v381 = vpop.xlane.xlu0 %380
    %v382 = vsel %vm225, %v376, -inf
    %383 = vmax.xlane.f32.xlu0 %v382
    %v384 = vpop.xlane.xlu0 %383
    %v385 = vsub.f32 %v298, %v381
    %v386 = vsub.f32 %v376, %v384
    %v387 = vmul.f32 %v385, 1.442695
    %v388 = vpow.pop %v387
    %v389 = vmul.f32 %v386, 1.442695
    %v390 = vpow.pop %v389
    %v391 = vsel %vm225, %v388, 0.0
    %392 = vadd.xlane.f32.xlu0 %v391
    %v393 = vpop.xlane.xlu0 %392
    %v394 = vsel %vm225, %v390, 0.0
    %395 = vadd.xlane.f32.xlu0 %v394
    %v396 = vpop.xlane.xlu0 %395
    %v397 = vrcp.pop %v393
    %v398 = vrcp.pop %v396
    %v399 = vmul.f32 %v388, %v397
    %v400 = vmul.f32 %v390, %v398
    %401 = vrot.lane.b32.xlu0 %v208, 64
    %v402 = vpop.permute.xlu0 %401
    %v405 = vsel %vm225, %v399, 0
    %407 = vmatprep.subr.mxu0 0.0
    %408 = vmatpush1.msra.mxu0 %v402
    %409 = vmatprep.subr.mxu0 0.0
    %410 = vmatpush1.msra.mxu0 0.0
    %411 = vmatprep.subr.mxu0 0.0
    %412 = vmatpush1.msra.mxu0 0.0
    %413 = vmatprep.subr.mxu0 0.0
    %414 = vmatpush1.msra.mxu0 0.0
    %415 = vmatprep.subr.mxu0 0.0
    %416 = vmatpush1.msra.mxu0 0.0
    %417 = vmatprep.subr.mxu0 0.0
    %418 = vmatpush1.msra.mxu0 0.0
    %419 = vmatprep.subr.mxu0 0.0
    %420 = vmatpush1.msra.mxu0 0.0
    %421 = vmatprep.subr.mxu0 0.0
    %422 = vmatpush1.msra.mxu0 0.0
    %423 = vmatprep.subr.mxu0 0.0
    %424 = vmatpush1.msra.mxu0 0.0
    %425 = vmatprep.subr.mxu0 0.0
    %426 = vmatpush1.msra.mxu0 0.0
    %427 = vmatprep.subr.mxu0 0.0
    %428 = vmatpush1.msra.mxu0 0.0
    %429 = vmatprep.subr.mxu0 0.0
    %430 = vmatpush1.msra.mxu0 0.0
    %431 = vmatprep.subr.mxu0 0.0
    %432 = vmatpush1.msra.mxu0 0.0
    %433 = vmatprep.subr.mxu0 0.0
    %434 = vmatpush1.msra.mxu0 0.0
    %435 = vmatprep.subr.mxu0 0.0
    %436 = vmatpush1.msra.mxu0 0.0
    %437 = vmatprep.subr.mxu0 0.0
    %438 = vmatpush1.msra.mxu0 0.0
    %439 = vmatprep.subr.mxu0 0.0
    %440 = vmatpush1.msra.mxu0 0.0
    %441 = vmatprep.subr.mxu0 0.0
    %442 = vmatpush1.msra.mxu0 0.0
    %443 = vmatprep.subr.mxu0 0.0
    %444 = vmatpush1.msra.mxu0 0.0
    %445 = vmatprep.subr.mxu0 0.0
    %446 = vmatpush1.msra.mxu0 0.0
    %447 = vmatprep.subr.mxu0 0.0
    %448 = vmatpush1.msra.mxu0 0.0
    %449 = vmatprep.subr.mxu0 0.0
    %450 = vmatpush1.msra.mxu0 0.0
    %451 = vmatprep.subr.mxu0 0.0
    %452 = vmatpush1.msra.mxu0 0.0
    %453 = vmatprep.subr.mxu0 0.0
    %454 = vmatpush1.msra.mxu0 0.0
    %455 = vmatprep.subr.mxu0 0.0
    %456 = vmatpush1.msra.mxu0 0.0
    %457 = vmatprep.subr.mxu0 0.0
    %458 = vmatpush1.msra.mxu0 0.0
    %459 = vmatprep.subr.mxu0 0.0
    %460 = vmatpush1.msra.mxu0 0.0
    %461 = vmatprep.subr.mxu0 0.0
    %462 = vmatpush1.msra.mxu0 0.0
    %463 = vmatprep.subr.mxu0 0.0
    %464 = vmatpush1.msra.mxu0 0.0
    %465 = vmatprep.subr.mxu0 0.0
    %466 = vmatpush1.msra.mxu0 0.0
    %467 = vmatprep.subr.mxu0 0.0
    %468 = vmatpush1.msra.mxu0 0.0
    %469 = vmatprep.subr.mxu0 0.0
    %470 = vmatpush1.msra.mxu0 0.0
    %471 = vmatprep.mubr.f32.mxu0 0.0
    %472 = vmatmul.mubr.f32.gmra.mrb[0].mxu0 %v405
    %v473 = vpop.f32.mrb[0].mxu0
    %v474 = vadd.f32 0.0, %v473
    %v475 = vpop.f32.mrb[0].mxu0
    %476 = vdwg.mxu0
    %477 = vrot.lane.b32.xlu0 %v213, 64
    %v478 = vpop.permute.xlu0 %477
    %v481 = vsel %vm225, %v400, 0
    %483 = vmatprep.subr.mxu0 0.0
    %484 = vmatpush1.msra.mxu0 %v478
    %485 = vmatprep.subr.mxu0 0.0
    %486 = vmatpush1.msra.mxu0 0.0
    %487 = vmatprep.subr.mxu0 0.0
    %488 = vmatpush1.msra.mxu0 0.0
    %489 = vmatprep.subr.mxu0 0.0
    %490 = vmatpush1.msra.mxu0 0.0
    %491 = vmatprep.subr.mxu0 0.0
    %492 = vmatpush1.msra.mxu0 0.0
    %493 = vmatprep.subr.mxu0 0.0
    %494 = vmatpush1.msra.mxu0 0.0
    %495 = vmatprep.subr.mxu0 0.0
    %496 = vmatpush1.msra.mxu0 0.0
    %497 = vmatprep.subr.mxu0 0.0
    %498 = vmatpush1.msra.mxu0 0.0
    %499 = vmatprep.subr.mxu0 0.0
    %500 = vmatpush1.msra.mxu0 0.0
    %501 = vmatprep.subr.mxu0 0.0
    %502 = vmatpush1.msra.mxu0 0.0
    %503 = vmatprep.subr.mxu0 0.0
    %504 = vmatpush1.msra.mxu0 0.0
    %505 = vmatprep.subr.mxu0 0.0
    %506 = vmatpush1.msra.mxu0 0.0
    %507 = vmatprep.subr.mxu0 0.0
    %508 = vmatpush1.msra.mxu0 0.0
    %509 = vmatprep.subr.mxu0 0.0
    %510 = vmatpush1.msra.mxu0 0.0
    %511 = vmatprep.subr.mxu0 0.0
    %512 = vmatpush1.msra.mxu0 0.0
    %513 = vmatprep.subr.mxu0 0.0
    %514 = vmatpush1.msra.mxu0 0.0
    %515 = vmatprep.subr.mxu0 0.0
    %516 = vmatpush1.msra.mxu0 0.0
    %517 = vmatprep.subr.mxu0 0.0
    %518 = vmatpush1.msra.mxu0 0.0
    %519 = vmatprep.subr.mxu0 0.0
    %520 = vmatpush1.msra.mxu0 0.0
    %521 = vmatprep.subr.mxu0 0.0
    %522 = vmatpush1.msra.mxu0 0.0
    %523 = vmatprep.subr.mxu0 0.0
    %524 = vmatpush1.msra.mxu0 0.0
    %525 = vmatprep.subr.mxu0 0.0
    %526 = vmatpush1.msra.mxu0 0.0
    %527 = vmatprep.subr.mxu0 0.0
    %528 = vmatpush1.msra.mxu0 0.0
    %529 = vmatprep.subr.mxu0 0.0
    %530 = vmatpush1.msra.mxu0 0.0
    %531 = vmatprep.subr.mxu0 0.0
    %532 = vmatpush1.msra.mxu0 0.0
    %533 = vmatprep.subr.mxu0 0.0
    %534 = vmatpush1.msra.mxu0 0.0
    %535 = vmatprep.subr.mxu0 0.0
    %536 = vmatpush1.msra.mxu0 0.0
    %537 = vmatprep.subr.mxu0 0.0
    %538 = vmatpush1.msra.mxu0 0.0
    %539 = vmatprep.subr.mxu0 0.0
    %540 = vmatpush1.msra.mxu0 0.0
    %541 = vmatprep.subr.mxu0 0.0
    %542 = vmatpush1.msra.mxu0 0.0
    %543 = vmatprep.subr.mxu0 0.0
    %544 = vmatpush1.msra.mxu0 0.0
    %545 = vmatprep.subr.mxu0 0.0
    %546 = vmatpush1.msra.mxu0 0.0
    %547 = vmatprep.mubr.f32.mxu0 0.0
    %548 = vmatmul.mubr.f32.gmra.mrb[0].mxu0 %v481
    %v549 = vpop.f32.mrb[0].mxu0
    %v550 = vadd.f32 0.0, %v549
    %v551 = vpop.f32.mrb[0].mxu0
    %552 = vdwg.mxu0
    %553 = vrot.lane.b32.xlu0 %v216, 120
    %v554 = vpop.permute.xlu0 %553
    %555 = vrot.lane.b32.xlu0 %v208, 88
    %v556 = vpop.permute.xlu0 %555
    %v557 = vsel %vm225, %v554, 0
    %v559 = vsel %vm225, %v556, 0
    %561 = vmatprep.subr.mxu0 0.0
    %562 = vmatpush1.xpose.msra.mxu0 %v559
    %563 = vmatprep.subr.mxu0 0.0
    %564 = vmatpush1.xpose.msra.mxu0 0.0
    %565 = vmatprep.subr.mxu0 0.0
    %566 = vmatpush1.xpose.msra.mxu0 0.0
    %567 = vmatprep.subr.mxu0 0.0
    %568 = vmatpush1.xpose.msra.mxu0 0.0
    %569 = vmatprep.subr.mxu0 0.0
    %570 = vmatpush1.xpose.msra.mxu0 0.0
    %571 = vmatprep.subr.mxu0 0.0
    %572 = vmatpush1.xpose.msra.mxu0 0.0
    %573 = vmatprep.subr.mxu0 0.0
    %574 = vmatpush1.xpose.msra.mxu0 0.0
    %575 = vmatprep.subr.mxu0 0.0
    %576 = vmatpush1.xpose.msra.mxu0 0.0
    %577 = vmatprep.subr.mxu0 0.0
    %578 = vmatpush1.xpose.msra.mxu0 0.0
    %579 = vmatprep.subr.mxu0 0.0
    %580 = vmatpush1.xpose.msra.mxu0 0.0
    %581 = vmatprep.subr.mxu0 0.0
    %582 = vmatpush1.xpose.msra.mxu0 0.0
    %583 = vmatprep.subr.mxu0 0.0
    %584 = vmatpush1.xpose.msra.mxu0 0.0
    %585 = vmatprep.subr.mxu0 0.0
    %586 = vmatpush1.xpose.msra.mxu0 0.0
    %587 = vmatprep.subr.mxu0 0.0
    %588 = vmatpush1.xpose.msra.mxu0 0.0
    %589 = vmatprep.subr.mxu0 0.0
    %590 = vmatpush1.xpose.msra.mxu0 0.0
    %591 = vmatprep.subr.mxu0 0.0
    %592 = vmatpush1.xpose.msra.mxu0 0.0
    %593 = vmatprep.subr.mxu0 0.0
    %594 = vmatpush1.xpose.msra.mxu0 0.0
    %595 = vmatprep.subr.mxu0 0.0
    %596 = vmatpush1.xpose.msra.mxu0 0.0
    %597 = vmatprep.subr.mxu0 0.0
    %598 = vmatpush1.xpose.msra.mxu0 0.0
    %599 = vmatprep.subr.mxu0 0.0
    %600 = vmatpush1.xpose.msra.mxu0 0.0
    %601 = vmatprep.subr.mxu0 0.0
    %602 = vmatpush1.xpose.msra.mxu0 0.0
    %603 = vmatprep.subr.mxu0 0.0
    %604 = vmatpush1.xpose.msra.mxu0 0.0
    %605 = vmatprep.subr.mxu0 0.0
    %606 = vmatpush1.xpose.msra.mxu0 0.0
    %607 = vmatprep.subr.mxu0 0.0
    %608 = vmatpush1.xpose.msra.mxu0 0.0
    %609 = vmatprep.subr.mxu0 0.0
    %610 = vmatpush1.xpose.msra.mxu0 0.0
    %611 = vmatprep.subr.mxu0 0.0
    %612 = vmatpush1.xpose.msra.mxu0 0.0
    %613 = vmatprep.subr.mxu0 0.0
    %614 = vmatpush1.xpose.msra.mxu0 0.0
    %615 = vmatprep.subr.mxu0 0.0
    %616 = vmatpush1.xpose.msra.mxu0 0.0
    %617 = vmatprep.subr.mxu0 0.0
    %618 = vmatpush1.xpose.msra.mxu0 0.0
    %619 = vmatprep.subr.mxu0 0.0
    %620 = vmatpush1.xpose.msra.mxu0 0.0
    %621 = vmatprep.subr.mxu0 0.0
    %622 = vmatpush1.xpose.msra.mxu0 0.0
    %623 = vmatprep.subr.mxu0 0.0
    %624 = vmatpush1.xpose.msra.mxu0 0.0
    %625 = vmatprep.mubr.f32.mxu0 0.0
    %626 = vmatmul.mubr.f32.gmra.mrb[0].mxu0 %v557
    %v627 = vpop.f32.mrb[0].mxu0
    %v628 = vadd.f32 0.0, %v627
    %v629 = vpop.f32.mrb[0].mxu0
    %630 = vdwg.mxu0
    %631 = vrot.lane.b32.xlu0 %v217, 120
    %v632 = vpop.permute.xlu0 %631
    %633 = vrot.lane.b32.xlu0 %v213, 88
    %v634 = vpop.permute.xlu0 %633
    %v635 = vsel %vm225, %v632, 0
    %v637 = vsel %vm225, %v634, 0
    %639 = vmatprep.subr.mxu0 0.0
    %640 = vmatpush1.xpose.msra.mxu0 %v637
    %641 = vmatprep.subr.mxu0 0.0
    %642 = vmatpush1.xpose.msra.mxu0 0.0
    %643 = vmatprep.subr.mxu0 0.0
    %644 = vmatpush1.xpose.msra.mxu0 0.0
    %645 = vmatprep.subr.mxu0 0.0
    %646 = vmatpush1.xpose.msra.mxu0 0.0
    %647 = vmatprep.subr.mxu0 0.0
    %648 = vmatpush1.xpose.msra.mxu0 0.0
    %649 = vmatprep.subr.mxu0 0.0
    %650 = vmatpush1.xpose.msra.mxu0 0.0
    %651 = vmatprep.subr.mxu0 0.0
    %652 = vmatpush1.xpose.msra.mxu0 0.0
    %653 = vmatprep.subr.mxu0 0.0
    %654 = vmatpush1.xpose.msra.mxu0 0.0
    %655 = vmatprep.subr.mxu0 0.0
    %656 = vmatpush1.xpose.msra.mxu0 0.0
    %657 = vmatprep.subr.mxu0 0.0
    %658 = vmatpush1.xpose.msra.mxu0 0.0
    %659 = vmatprep.subr.mxu0 0.0
    %660 = vmatpush1.xpose.msra.mxu0 0.0
    %661 = vmatprep.subr.mxu0 0.0
    %662 = vmatpush1.xpose.msra.mxu0 0.0
    %663 = vmatprep.subr.mxu0 0.0
    %664 = vmatpush1.xpose.msra.mxu0 0.0
    %665 = vmatprep.subr.mxu0 0.0
    %666 = vmatpush1.xpose.msra.mxu0 0.0
    %667 = vmatprep.subr.mxu0 0.0
    %668 = vmatpush1.xpose.msra.mxu0 0.0
    %669 = vmatprep.subr.mxu0 0.0
    %670 = vmatpush1.xpose.msra.mxu0 0.0
    %671 = vmatprep.subr.mxu0 0.0
    %672 = vmatpush1.xpose.msra.mxu0 0.0
    %673 = vmatprep.subr.mxu0 0.0
    %674 = vmatpush1.xpose.msra.mxu0 0.0
    %675 = vmatprep.subr.mxu0 0.0
    %676 = vmatpush1.xpose.msra.mxu0 0.0
    %677 = vmatprep.subr.mxu0 0.0
    %678 = vmatpush1.xpose.msra.mxu0 0.0
    %679 = vmatprep.subr.mxu0 0.0
    %680 = vmatpush1.xpose.msra.mxu0 0.0
    %681 = vmatprep.subr.mxu0 0.0
    %682 = vmatpush1.xpose.msra.mxu0 0.0
    %683 = vmatprep.subr.mxu0 0.0
    %684 = vmatpush1.xpose.msra.mxu0 0.0
    %685 = vmatprep.subr.mxu0 0.0
    %686 = vmatpush1.xpose.msra.mxu0 0.0
    %687 = vmatprep.subr.mxu0 0.0
    %688 = vmatpush1.xpose.msra.mxu0 0.0
    %689 = vmatprep.subr.mxu0 0.0
    %690 = vmatpush1.xpose.msra.mxu0 0.0
    %691 = vmatprep.subr.mxu0 0.0
    %692 = vmatpush1.xpose.msra.mxu0 0.0
    %693 = vmatprep.subr.mxu0 0.0
    %694 = vmatpush1.xpose.msra.mxu0 0.0
    %695 = vmatprep.subr.mxu0 0.0
    %696 = vmatpush1.xpose.msra.mxu0 0.0
    %697 = vmatprep.subr.mxu0 0.0
    %698 = vmatpush1.xpose.msra.mxu0 0.0
    %699 = vmatprep.subr.mxu0 0.0
    %700 = vmatpush1.xpose.msra.mxu0 0.0
    %701 = vmatprep.subr.mxu0 0.0
    %702 = vmatpush1.xpose.msra.mxu0 0.0
    %703 = vmatprep.mubr.f32.mxu0 0.0
    %704 = vmatmul.mubr.f32.gmra.mrb[0].mxu0 %v635
    %v705 = vpop.f32.mrb[0].mxu0
    %v706 = vadd.f32 0.0, %v705
    %v707 = vpop.f32.mrb[0].mxu0
    %708 = vdwg.mxu0
    %v709 = vsel %vm225, %v628, -inf
    %710 = vmax.xlane.f32.xlu0 %v709
    %v711 = vpop.xlane.xlu0 %710
    %v712 = vsel %vm225, %v706, -inf
    %713 = vmax.xlane.f32.xlu0 %v712
    %v714 = vpop.xlane.xlu0 %713
    %v715 = vsub.f32 %v628, %v711
    %v716 = vsub.f32 %v706, %v714
    %v717 = vmul.f32 %v715, 1.442695
    %v718 = vpow.pop %v717
    %v719 = vmul.f32 %v716, 1.442695
    %v720 = vpow.pop %v719
    %v721 = vsel %vm225, %v718, 0.0
    %722 = vadd.xlane.f32.xlu0 %v721
    %v723 = vpop.xlane.xlu0 %722
    %v724 = vsel %vm225, %v720, 0.0
    %725 = vadd.xlane.f32.xlu0 %v724
    %v726 = vpop.xlane.xlu0 %725
    %v727 = vrcp.pop %v723
    %v728 = vrcp.pop %v726
    %v729 = vmul.f32 %v718, %v727
    %v730 = vmul.f32 %v720, %v728
    %731 = vrot.lane.b32.xlu0 %v208, 56
    %v732 = vpop.permute.xlu0 %731
    %v735 = vsel %vm225, %v729, 0
    %737 = vmatprep.subr.mxu0 0.0
    %738 = vmatpush1.msra.mxu0 %v732
    %739 = vmatprep.subr.mxu0 0.0
    %740 = vmatpush1.msra.mxu0 0.0
    %741 = vmatprep.subr.mxu0 0.0
    %742 = vmatpush1.msra.mxu0 0.0
    %743 = vmatprep.subr.mxu0 0.0
    %744 = vmatpush1.msra.mxu0 0.0
    %745 = vmatprep.subr.mxu0 0.0
    %746 = vmatpush1.msra.mxu0 0.0
    %747 = vmatprep.subr.mxu0 0.0
    %748 = vmatpush1.msra.mxu0 0.0
    %749 = vmatprep.subr.mxu0 0.0
    %750 = vmatpush1.msra.mxu0 0.0
    %751 = vmatprep.subr.mxu0 0.0
    %752 = vmatpush1.msra.mxu0 0.0
    %753 = vmatprep.subr.mxu0 0.0
    %754 = vmatpush1.msra.mxu0 0.0
    %755 = vmatprep.subr.mxu0 0.0
    %756 = vmatpush1.msra.mxu0 0.0
    %757 = vmatprep.subr.mxu0 0.0
    %758 = vmatpush1.msra.mxu0 0.0
    %759 = vmatprep.subr.mxu0 0.0
    %760 = vmatpush1.msra.mxu0 0.0
    %761 = vmatprep.subr.mxu0 0.0
    %762 = vmatpush1.msra.mxu0 0.0
    %763 = vmatprep.subr.mxu0 0.0
    %764 = vmatpush1.msra.mxu0 0.0
    %765 = vmatprep.subr.mxu0 0.0
    %766 = vmatpush1.msra.mxu0 0.0
    %767 = vmatprep.subr.mxu0 0.0
    %768 = vmatpush1.msra.mxu0 0.0
    %769 = vmatprep.subr.mxu0 0.0
    %770 = vmatpush1.msra.mxu0 0.0
    %771 = vmatprep.subr.mxu0 0.0
    %772 = vmatpush1.msra.mxu0 0.0
    %773 = vmatprep.subr.mxu0 0.0
    %774 = vmatpush1.msra.mxu0 0.0
    %775 = vmatprep.subr.mxu0 0.0
    %776 = vmatpush1.msra.mxu0 0.0
    %777 = vmatprep.subr.mxu0 0.0
    %778 = vmatpush1.msra.mxu0 0.0
    %779 = vmatprep.subr.mxu0 0.0
    %780 = vmatpush1.msra.mxu0 0.0
    %781 = vmatprep.subr.mxu0 0.0
    %782 = vmatpush1.msra.mxu0 0.0
    %783 = vmatprep.subr.mxu0 0.0
    %784 = vmatpush1.msra.mxu0 0.0
    %785 = vmatprep.subr.mxu0 0.0
    %786 = vmatpush1.msra.mxu0 0.0
    %787 = vmatprep.subr.mxu0 0.0
    %788 = vmatpush1.msra.mxu0 0.0
    %789 = vmatprep.subr.mxu0 0.0
    %790 = vmatpush1.msra.mxu0 0.0
    %791 = vmatprep.subr.mxu0 0.0
    %792 = vmatpush1.msra.mxu0 0.0
    %793 = vmatprep.subr.mxu0 0.0
    %794 = vmatpush1.msra.mxu0 0.0
    %795 = vmatprep.subr.mxu0 0.0
    %796 = vmatpush1.msra.mxu0 0.0
    %797 = vmatprep.subr.mxu0 0.0
    %798 = vmatpush1.msra.mxu0 0.0
    %799 = vmatprep.subr.mxu0 0.0
    %800 = vmatpush1.msra.mxu0 0.0
    %801 = vmatprep.mubr.f32.mxu0 0.0
    %802 = vmatmul.mubr.f32.gmra.mrb[0].mxu0 %v735
    %v803 = vpop.f32.mrb[0].mxu0
    %v804 = vadd.f32 0.0, %v803
    %v805 = vpop.f32.mrb[0].mxu0
    %806 = vdwg.mxu0
    %807 = vrot.lane.b32.xlu0 %v213, 56
    %v808 = vpop.permute.xlu0 %807
    %v811 = vsel %vm225, %v730, 0
    %813 = vmatprep.subr.mxu0 0.0
    %814 = vmatpush1.msra.mxu0 %v808
    %815 = vmatprep.subr.mxu0 0.0
    %816 = vmatpush1.msra.mxu0 0.0
    %817 = vmatprep.subr.mxu0 0.0
    %818 = vmatpush1.msra.mxu0 0.0
    %819 = vmatprep.subr.mxu0 0.0
    %820 = vmatpush1.msra.mxu0 0.0
    %821 = vmatprep.subr.mxu0 0.0
    %822 = vmatpush1.msra.mxu0 0.0
    %823 = vmatprep.subr.mxu0 0.0
    %824 = vmatpush1.msra.mxu0 0.0
    %825 = vmatprep.subr.mxu0 0.0
    %826 = vmatpush1.msra.mxu0 0.0
    %827 = vmatprep.subr.mxu0 0.0
    %828 = vmatpush1.msra.mxu0 0.0
    %829 = vmatprep.subr.mxu0 0.0
    %830 = vmatpush1.msra.mxu0 0.0
    %831 = vmatprep.subr.mxu0 0.0
    %832 = vmatpush1.msra.mxu0 0.0
    %833 = vmatprep.subr.mxu0 0.0
    %834 = vmatpush1.msra.mxu0 0.0
    %835 = vmatprep.subr.mxu0 0.0
    %836 = vmatpush1.msra.mxu0 0.0
    %837 = vmatprep.subr.mxu0 0.0
    %838 = vmatpush1.msra.mxu0 0.0
    %839 = vmatprep.subr.mxu0 0.0
    %840 = vmatpush1.msra.mxu0 0.0
    %841 = vmatprep.subr.mxu0 0.0
    %842 = vmatpush1.msra.mxu0 0.0
    %843 = vmatprep.subr.mxu0 0.0
    %844 = vmatpush1.msra.mxu0 0.0
    %845 = vmatprep.subr.mxu0 0.0
    %846 = vmatpush1.msra.mxu0 0.0
    %847 = vmatprep.subr.mxu0 0.0
    %848 = vmatpush1.msra.mxu0 0.0
    %849 = vmatprep.subr.mxu0 0.0
    %850 = vmatpush1.msra.mxu0 0.0
    %851 = vmatprep.subr.mxu0 0.0
    %852 = vmatpush1.msra.mxu0 0.0
    %853 = vmatprep.subr.mxu0 0.0
    %854 = vmatpush1.msra.mxu0 0.0
    %855 = vmatprep.subr.mxu0 0.0
    %856 = vmatpush1.msra.mxu0 0.0
    %857 = vmatprep.subr.mxu0 0.0
    %858 = vmatpush1.msra.mxu0 0.0
    %859 = vmatprep.subr.mxu0 0.0
    %860 = vmatpush1.msra.mxu0 0.0
    %861 = vmatprep.subr.mxu0 0.0
    %862 = vmatpush1.msra.mxu0 0.0
    %863 = vmatprep.subr.mxu0 0.0
    %864 = vmatpush1.msra.mxu0 0.0
    %865 = vmatprep.subr.mxu0 0.0
    %866 = vmatpush1.msra.mxu0 0.0
    %867 = vmatprep.subr.mxu0 0.0
    %868 = vmatpush1.msra.mxu0 0.0
    %869 = vmatprep.subr.mxu0 0.0
    %870 = vmatpush1.msra.mxu0 0.0
    %871 = vmatprep.subr.mxu0 0.0
    %872 = vmatpush1.msra.mxu0 0.0
    %873 = vmatprep.subr.mxu0 0.0
    %874 = vmatpush1.msra.mxu0 0.0
    %875 = vmatprep.subr.mxu0 0.0
    %876 = vmatpush1.msra.mxu0 0.0
    %877 = vmatprep.mubr.f32.mxu0 0.0
    %878 = vmatmul.mubr.f32.gmra.mrb[0].mxu0 %v811
    %v879 = vpop.f32.mrb[0].mxu0
    %v880 = vadd.f32 0.0, %v879
    %v881 = vpop.f32.mrb[0].mxu0
    %882 = vdwg.mxu0
    %v884 = vsel %vm225, %v804, 0
    %v887 = vsel %vm225, %v880, 0
    %889 = vmatprep.subr.mxu0 0.0
    %890 = vmatpush1.msra.mxu0 %v219
    %891 = vmatprep.subr.mxu0 0.0
    %892 = vmatpush1.msra.mxu0 0.0
    %893 = vmatprep.subr.mxu0 0.0
    %894 = vmatpush1.msra.mxu0 0.0
    %895 = vmatprep.subr.mxu0 0.0
    %896 = vmatpush1.msra.mxu0 0.0
    %897 = vmatprep.subr.mxu0 0.0
    %898 = vmatpush1.msra.mxu0 0.0
    %899 = vmatprep.subr.mxu0 0.0
    %900 = vmatpush1.msra.mxu0 0.0
    %901 = vmatprep.subr.mxu0 0.0
    %902 = vmatpush1.msra.mxu0 0.0
    %903 = vmatprep.subr.mxu0 0.0
    %904 = vmatpush1.msra.mxu0 0.0
    %905 = vmatprep.subr.mxu0 0.0
    %906 = vmatpush1.msra.mxu0 0.0
    %907 = vmatprep.subr.mxu0 0.0
    %908 = vmatpush1.msra.mxu0 0.0
    %909 = vmatprep.subr.mxu0 0.0
    %910 = vmatpush1.msra.mxu0 0.0
    %911 = vmatprep.subr.mxu0 0.0
    %912 = vmatpush1.msra.mxu0 0.0
    %913 = vmatprep.subr.mxu0 0.0
    %914 = vmatpush1.msra.mxu0 0.0
    %915 = vmatprep.subr.mxu0 0.0
    %916 = vmatpush1.msra.mxu0 0.0
    %917 = vmatprep.subr.mxu0 0.0
    %918 = vmatpush1.msra.mxu0 0.0
    %919 = vmatprep.subr.mxu0 0.0
    %920 = vmatpush1.msra.mxu0 0.0
    %921 = vmatprep.subr.mxu0 0.0
    %922 = vmatpush1.msra.mxu0 0.0
    %923 = vmatprep.subr.mxu0 0.0
    %924 = vmatpush1.msra.mxu0 0.0
    %925 = vmatprep.subr.mxu0 0.0
    %926 = vmatpush1.msra.mxu0 0.0
    %927 = vmatprep.subr.mxu0 0.0
    %928 = vmatpush1.msra.mxu0 0.0
    %929 = vmatprep.subr.mxu0 0.0
    %930 = vmatpush1.msra.mxu0 0.0
    %931 = vmatprep.subr.mxu0 0.0
    %932 = vmatpush1.msra.mxu0 0.0
    %933 = vmatprep.subr.mxu0 0.0
    %934 = vmatpush1.msra.mxu0 0.0
    %935 = vmatprep.subr.mxu0 0.0
    %936 = vmatpush1.msra.mxu0 0.0
    %937 = vmatprep.subr.mxu0 0.0
    %938 = vmatpush1.msra.mxu0 0.0
    %939 = vmatprep.subr.mxu0 0.0
    %940 = vmatpush1.msra.mxu0 0.0
    %941 = vmatprep.subr.mxu0 0.0
    %942 = vmatpush1.msra.mxu0 0.0
    %943 = vmatprep.subr.mxu0 0.0
    %944 = vmatpush1.msra.mxu0 0.0
    %945 = vmatprep.subr.mxu0 0.0
    %946 = vmatpush1.msra.mxu0 0.0
    %947 = vmatprep.subr.mxu0 0.0
    %948 = vmatpush1.msra.mxu0 0.0
    %949 = vmatprep.subr.mxu0 0.0
    %950 = vmatpush1.msra.mxu0 0.0
    %951 = vmatprep.subr.mxu0 0.0
    %952 = vmatpush1.msra.mxu0 0.0
    %953 = vmatprep.mubr.f32.mxu0 0.0
    %954 = vmatmul.mubr.f32.gmra.mrb[0].mxu0 %v884
    %v955 = vpop.f32.mrb[0].mxu0
    %v956 = vadd.f32 0.0, %v955
    %v957 = vpop.f32.mrb[0].mxu0
    %958 = vmatprep.mubr.f32.mxu0 0.0
    %959 = vmatmul.mubr.f32.gmra.mrb[0].mxu0 %v887
    %v960 = vpop.f32.mrb[0].mxu0
    %v961 = vadd.f32 0.0, %v960
    %v962 = vpop.f32.mrb[0].mxu0
    %963 = vdwg.mxu0
    %v965 = vsel %vm225, %v474, 0
    %v968 = vsel %vm225, %v550, 0
    %970 = vmatprep.subr.mxu0 0.0
    %971 = vmatpush1.msra.mxu0 %v218
    %972 = vmatprep.subr.mxu0 0.0
    %973 = vmatpush1.msra.mxu0 0.0
    %974 = vmatprep.subr.mxu0 0.0
    %975 = vmatpush1.msra.mxu0 0.0
    %976 = vmatprep.subr.mxu0 0.0
    %977 = vmatpush1.msra.mxu0 0.0
    %978 = vmatprep.subr.mxu0 0.0
    %979 = vmatpush1.msra.mxu0 0.0
    %980 = vmatprep.subr.mxu0 0.0
    %981 = vmatpush1.msra.mxu0 0.0
    %982 = vmatprep.subr.mxu0 0.0
    %983 = vmatpush1.msra.mxu0 0.0
    %984 = vmatprep.subr.mxu0 0.0
    %985 = vmatpush1.msra.mxu0 0.0
    %986 = vmatprep.subr.mxu0 0.0
    %987 = vmatpush1.msra.mxu0 0.0
    %988 = vmatprep.subr.mxu0 0.0
    %989 = vmatpush1.msra.mxu0 0.0
    %990 = vmatprep.subr.mxu0 0.0
    %991 = vmatpush1.msra.mxu0 0.0
    %992 = vmatprep.subr.mxu0 0.0
    %993 = vmatpush1.msra.mxu0 0.0
    %994 = vmatprep.subr.mxu0 0.0
    %995 = vmatpush1.msra.mxu0 0.0
    %996 = vmatprep.subr.mxu0 0.0
    %997 = vmatpush1.msra.mxu0 0.0
    %998 = vmatprep.subr.mxu0 0.0
    %999 = vmatpush1.msra.mxu0 0.0
    %1000 = vmatprep.subr.mxu0 0.0
    %1001 = vmatpush1.msra.mxu0 0.0
    %1002 = vmatprep.subr.mxu0 0.0
    %1003 = vmatpush1.msra.mxu0 0.0
    %1004 = vmatprep.subr.mxu0 0.0
    %1005 = vmatpush1.msra.mxu0 0.0
    %1006 = vmatprep.subr.mxu0 0.0
    %1007 = vmatpush1.msra.mxu0 0.0
    %1008 = vmatprep.subr.mxu0 0.0
    %1009 = vmatpush1.msra.mxu0 0.0
    %1010 = vmatprep.subr.mxu0 0.0
    %1011 = vmatpush1.msra.mxu0 0.0
    %1012 = vmatprep.subr.mxu0 0.0
    %1013 = vmatpush1.msra.mxu0 0.0
    %1014 = vmatprep.subr.mxu0 0.0
    %1015 = vmatpush1.msra.mxu0 0.0
    %1016 = vmatprep.subr.mxu0 0.0
    %1017 = vmatpush1.msra.mxu0 0.0
    %1018 = vmatprep.subr.mxu0 0.0
    %1019 = vmatpush1.msra.mxu0 0.0
    %1020 = vmatprep.subr.mxu0 0.0
    %1021 = vmatpush1.msra.mxu0 0.0
    %1022 = vmatprep.subr.mxu0 0.0
    %1023 = vmatpush1.msra.mxu0 0.0
    %1024 = vmatprep.subr.mxu0 0.0
    %1025 = vmatpush1.msra.mxu0 0.0
    %1026 = vmatprep.subr.mxu0 0.0
    %1027 = vmatpush1.msra.mxu0 0.0
    %1028 = vmatprep.subr.mxu0 0.0
    %1029 = vmatpush1.msra.mxu0 0.0
    %1030 = vmatprep.subr.mxu0 0.0
    %1031 = vmatpush1.msra.mxu0 0.0
    %1032 = vmatprep.subr.mxu0 0.0
    %1033 = vmatpush1.msra.mxu0 0.0
    %1034 = vmatprep.mubr.f32.mxu0 0.0
    %1035 = vmatmul.mubr.f32.gmra.mrb[0].mxu0 %v965
    %v1036 = vpop.f32.mrb[0].mxu0
    %v1037 = vadd.f32 %v956, %v1036
    %v1038 = vpop.f32.mrb[0].mxu0
    %1039 = vmatprep.mubr.f32.mxu0 0.0
    %1040 = vmatmul.mubr.f32.gmra.mrb[0].mxu0 %v968
    %v1041 = vpop.f32.mrb[0].mxu0
    %v1042 = vadd.f32 %v961, %v1041
    %v1043 = vpop.f32.mrb[0].mxu0
    %1044 = vdwg.mxu0
    %1045 = vrot.lane.b32.xlu0 %v216, 112
    %v1046 = vpop.permute.xlu0 %1045
    %1047 = vrot.lane.b32.xlu0 %v208, 80
    %v1048 = vpop.permute.xlu0 %1047
    %v1049 = vsel %vm225, %v1046, 0
    %v1051 = vsel %vm225, %v1048, 0
    %1053 = vmatprep.subr.mxu0 0.0
    %1054 = vmatpush1.xpose.msra.mxu0 %v1051
    %1055 = vmatprep.subr.mxu0 0.0
    %1056 = vmatpush1.xpose.msra.mxu0 0.0
    %1057 = vmatprep.subr.mxu0 0.0
    %1058 = vmatpush1.xpose.msra.mxu0 0.0
    %1059 = vmatprep.subr.mxu0 0.0
    %1060 = vmatpush1.xpose.msra.mxu0 0.0
    %1061 = vmatprep.subr.mxu0 0.0
    %1062 = vmatpush1.xpose.msra.mxu0 0.0
    %1063 = vmatprep.subr.mxu0 0.0
    %1064 = vmatpush1.xpose.msra.mxu0 0.0
    %1065 = vmatprep.subr.mxu0 0.0
    %1066 = vmatpush1.xpose.msra.mxu0 0.0
    %1067 = vmatprep.subr.mxu0 0.0
    %1068 = vmatpush1.xpose.msra.mxu0 0.0
    %1069 = vmatprep.subr.mxu0 0.0
    %1070 = vmatpush1.xpose.msra.mxu0 0.0
    %1071 = vmatprep.subr.mxu0 0.0
    %1072 = vmatpush1.xpose.msra.mxu0 0.0
    %1073 = vmatprep.subr.mxu0 0.0
    %1074 = vmatpush1.xpose.msra.mxu0 0.0
    %1075 = vmatprep.subr.mxu0 0.0
    %1076 = vmatpush1.xpose.msra.mxu0 0.0
    %1077 = vmatprep.subr.mxu0 0.0
    %1078 = vmatpush1.xpose.msra.mxu0 0.0
    %1079 = vmatprep.subr.mxu0 0.0
    %1080 = vmatpush1.xpose.msra.mxu0 0.0
    %1081 = vmatprep.subr.mxu0 0.0
    %1082 = vmatpush1.xpose.msra.mxu0 0.0
    %1083 = vmatprep.subr.mxu0 0.0
    %1084 = vmatpush1.xpose.msra.mxu0 0.0
    %1085 = vmatprep.subr.mxu0 0.0
    %1086 = vmatpush1.xpose.msra.mxu0 0.0
    %1087 = vmatprep.subr.mxu0 0.0
    %1088 = vmatpush1.xpose.msra.mxu0 0.0
    %1089 = vmatprep.subr.mxu0 0.0
    %1090 = vmatpush1.xpose.msra.mxu0 0.0
    %1091 = vmatprep.subr.mxu0 0.0
    %1092 = vmatpush1.xpose.msra.mxu0 0.0
    %1093 = vmatprep.subr.mxu0 0.0
    %1094 = vmatpush1.xpose.msra.mxu0 0.0
    %1095 = vmatprep.subr.mxu0 0.0
    %1096 = vmatpush1.xpose.msra.mxu0 0.0
    %1097 = vmatprep.subr.mxu0 0.0
    %1098 = vmatpush1.xpose.msra.mxu0 0.0
    %1099 = vmatprep.subr.mxu0 0.0
    %1100 = vmatpush1.xpose.msra.mxu0 0.0
    %1101 = vmatprep.subr.mxu0 0.0
    %1102 = vmatpush1.xpose.msra.mxu0 0.0
    %1103 = vmatprep.subr.mxu0 0.0
    %1104 = vmatpush1.xpose.msra.mxu0 0.0
    %1105 = vmatprep.subr.mxu0 0.0
    %1106 = vmatpush1.xpose.msra.mxu0 0.0
    %1107 = vmatprep.subr.mxu0 0.0
    %1108 = vmatpush1.xpose.msra.mxu0 0.0
    %1109 = vmatprep.subr.mxu0 0.0
    %1110 = vmatpush1.xpose.msra.mxu0 0.0
    %1111 = vmatprep.subr.mxu0 0.0
    %1112 = vmatpush1.xpose.msra.mxu0 0.0
    %1113 = vmatprep.subr.mxu0 0.0
    %1114 = vmatpush1.xpose.msra.mxu0 0.0
    %1115 = vmatprep.subr.mxu0 0.0
    %1116 = vmatpush1.xpose.msra.mxu0 0.0
    %1117 = vmatprep.mubr.f32.mxu0 0.0
    %1118 = vmatmul.mubr.f32.gmra.mrb[0].mxu0 %v1049
    %v1119 = vpop.f32.mrb[0].mxu0
    %v1120 = vadd.f32 0.0, %v1119
    %v1121 = vpop.f32.mrb[0].mxu0
    %1122 = vdwg.mxu0
    %1123 = vrot.lane.b32.xlu0 %v217, 112
    %v1124 = vpop.permute.xlu0 %1123
    %1125 = vrot.lane.b32.xlu0 %v213, 80
    %v1126 = vpop.permute.xlu0 %1125
    %v1127 = vsel %vm225, %v1124, 0
    %v1129 = vsel %vm225, %v1126, 0
    %1131 = vmatprep.subr.mxu0 0.0
    %1132 = vmatpush1.xpose.msra.mxu0 %v1129
    %1133 = vmatprep.subr.mxu0 0.0
    %1134 = vmatpush1.xpose.msra.mxu0 0.0
    %1135 = vmatprep.subr.mxu0 0.0
    %1136 = vmatpush1.xpose.msra.mxu0 0.0
    %1137 = vmatprep.subr.mxu0 0.0
    %1138 = vmatpush1.xpose.msra.mxu0 0.0
    %1139 = vmatprep.subr.mxu0 0.0
    %1140 = vmatpush1.xpose.msra.mxu0 0.0
    %1141 = vmatprep.subr.mxu0 0.0
    %1142 = vmatpush1.xpose.msra.mxu0 0.0
    %1143 = vmatprep.subr.mxu0 0.0
    %1144 = vmatpush1.xpose.msra.mxu0 0.0
    %1145 = vmatprep.subr.mxu0 0.0
    %1146 = vmatpush1.xpose.msra.mxu0 0.0
    %1147 = vmatprep.subr.mxu0 0.0
    %1148 = vmatpush1.xpose.msra.mxu0 0.0
    %1149 = vmatprep.subr.mxu0 0.0
    %1150 = vmatpush1.xpose.msra.mxu0 0.0
    %1151 = vmatprep.subr.mxu0 0.0
    %1152 = vmatpush1.xpose.msra.mxu0 0.0
    %1153 = vmatprep.subr.mxu0 0.0
    %1154 = vmatpush1.xpose.msra.mxu0 0.0
    %1155 = vmatprep.subr.mxu0 0.0
    %1156 = vmatpush1.xpose.msra.mxu0 0.0
    %1157 = vmatprep.subr.mxu0 0.0
    %1158 = vmatpush1.xpose.msra.mxu0 0.0
    %1159 = vmatprep.subr.mxu0 0.0
    %1160 = vmatpush1.xpose.msra.mxu0 0.0
    %1161 = vmatprep.subr.mxu0 0.0
    %1162 = vmatpush1.xpose.msra.mxu0 0.0
    %1163 = vmatprep.subr.mxu0 0.0
    %1164 = vmatpush1.xpose.msra.mxu0 0.0
    %1165 = vmatprep.subr.mxu0 0.0
    %1166 = vmatpush1.xpose.msra.mxu0 0.0
    %1167 = vmatprep.subr.mxu0 0.0
    %1168 = vmatpush1.xpose.msra.mxu0 0.0
    %1169 = vmatprep.subr.mxu0 0.0
    %1170 = vmatpush1.xpose.msra.mxu0 0.0
    %1171 = vmatprep.subr.mxu0 0.0
    %1172 = vmatpush1.xpose.msra.mxu0 0.0
    %1173 = vmatprep.subr.mxu0 0.0
    %1174 = vmatpush1.xpose.msra.mxu0 0.0
    %1175 = vmatprep.subr.mxu0 0.0
    %1176 = vmatpush1.xpose.msra.mxu0 0.0
    %1177 = vmatprep.subr.mxu0 0.0
    %1178 = vmatpush1.xpose.msra.mxu0 0.0
    %1179 = vmatprep.subr.mxu0 0.0
    %1180 = vmatpush1.xpose.msra.mxu0 0.0
    %1181 = vmatprep.subr.mxu0 0.0
    %1182 = vmatpush1.xpose.msra.mxu0 0.0
    %1183 = vmatprep.subr.mxu0 0.0
    %1184 = vmatpush1.xpose.msra.mxu0 0.0
    %1185 = vmatprep.subr.mxu0 0.0
    %1186 = vmatpush1.xpose.msra.mxu0 0.0
    %1187 = vmatprep.subr.mxu0 0.0
    %1188 = vmatpush1.xpose.msra.mxu0 0.0
    %1189 = vmatprep.subr.mxu0 0.0
    %1190 = vmatpush1.xpose.msra.mxu0 0.0
    %1191 = vmatprep.subr.mxu0 0.0
    %1192 = vmatpush1.xpose.msra.mxu0 0.0
    %1193 = vmatprep.subr.mxu0 0.0
    %1194 = vmatpush1.xpose.msra.mxu0 0.0
    %1195 = vmatprep.mubr.f32.mxu0 0.0
    %1196 = vmatmul.mubr.f32.gmra.mrb[0].mxu0 %v1127
    %v1197 = vpop.f32.mrb[0].mxu0
    %v1198 = vadd.f32 0.0, %v1197
    %v1199 = vpop.f32.mrb[0].mxu0
    %1200 = vdwg.mxu0
    %v1201 = vsel %vm225, %v1120, -inf
    %1202 = vmax.xlane.f32.xlu0 %v1201
    %v1203 = vpop.xlane.xlu0 %1202
    %v1204 = vsel %vm225, %v1198, -inf
    %1205 = vmax.xlane.f32.xlu0 %v1204
    %v1206 = vpop.xlane.xlu0 %1205
    %v1207 = vsub.f32 %v1120, %v1203
    %v1208 = vsub.f32 %v1198, %v1206
    %v1209 = vmul.f32 %v1207, 1.442695
    %v1210 = vpow.pop %v1209
    %v1211 = vmul.f32 %v1208, 1.442695
    %v1212 = vpow.pop %v1211
    %v1213 = vsel %vm225, %v1210, 0.0
    %1214 = vadd.xlane.f32.xlu0 %v1213
    %v1215 = vpop.xlane.xlu0 %1214
    %v1216 = vsel %vm225, %v1212, 0.0
    %1217 = vadd.xlane.f32.xlu0 %v1216
    %v1218 = vpop.xlane.xlu0 %1217
    %v1219 = vrcp.pop %v1215
    %v1220 = vrcp.pop %v1218
    %v1221 = vmul.f32 %v1210, %v1219
    %v1222 = vmul.f32 %v1212, %v1220
    %1223 = vrot.lane.b32.xlu0 %v208, 48
    %v1224 = vpop.permute.xlu0 %1223
    %v1227 = vsel %vm225, %v1221, 0
    %1229 = vmatprep.subr.mxu0 0.0
    %1230 = vmatpush1.msra.mxu0 %v1224
    %1231 = vmatprep.subr.mxu0 0.0
    %1232 = vmatpush1.msra.mxu0 0.0
    %1233 = vmatprep.subr.mxu0 0.0
    %1234 = vmatpush1.msra.mxu0 0.0
    %1235 = vmatprep.subr.mxu0 0.0
    %1236 = vmatpush1.msra.mxu0 0.0
    %1237 = vmatprep.subr.mxu0 0.0
    %1238 = vmatpush1.msra.mxu0 0.0
    %1239 = vmatprep.subr.mxu0 0.0
    %1240 = vmatpush1.msra.mxu0 0.0
    %1241 = vmatprep.subr.mxu0 0.0
    %1242 = vmatpush1.msra.mxu0 0.0
    %1243 = vmatprep.subr.mxu0 0.0
    %1244 = vmatpush1.msra.mxu0 0.0
    %1245 = vmatprep.subr.mxu0 0.0
    %1246 = vmatpush1.msra.mxu0 0.0
    %1247 = vmatprep.subr.mxu0 0.0
    %1248 = vmatpush1.msra.mxu0 0.0
    %1249 = vmatprep.subr.mxu0 0.0
    %1250 = vmatpush1.msra.mxu0 0.0
    %1251 = vmatprep.subr.mxu0 0.0
    %1252 = vmatpush1.msra.mxu0 0.0
    %1253 = vmatprep.subr.mxu0 0.0
    %1254 = vmatpush1.msra.mxu0 0.0
    %1255 = vmatprep.subr.mxu0 0.0
    %1256 = vmatpush1.msra.mxu0 0.0
    %1257 = vmatprep.subr.mxu0 0.0
    %1258 = vmatpush1.msra.mxu0 0.0
    %1259 = vmatprep.subr.mxu0 0.0
    %1260 = vmatpush1.msra.mxu0 0.0
    %1261 = vmatprep.subr.mxu0 0.0
    %1262 = vmatpush1.msra.mxu0 0.0
    %1263 = vmatprep.subr.mxu0 0.0
    %1264 = vmatpush1.msra.mxu0 0.0
    %1265 = vmatprep.subr.mxu0 0.0
    %1266 = vmatpush1.msra.mxu0 0.0
    %1267 = vmatprep.subr.mxu0 0.0
    %1268 = vmatpush1.msra.mxu0 0.0
    %1269 = vmatprep.subr.mxu0 0.0
    %1270 = vmatpush1.msra.mxu0 0.0
    %1271 = vmatprep.subr.mxu0 0.0
    %1272 = vmatpush1.msra.mxu0 0.0
    %1273 = vmatprep.subr.mxu0 0.0
    %1274 = vmatpush1.msra.mxu0 0.0
    %1275 = vmatprep.subr.mxu0 0.0
    %1276 = vmatpush1.msra.mxu0 0.0
    %1277 = vmatprep.subr.mxu0 0.0
    %1278 = vmatpush1.msra.mxu0 0.0
    %1279 = vmatprep.subr.mxu0 0.0
    %1280 = vmatpush1.msra.mxu0 0.0
    %1281 = vmatprep.subr.mxu0 0.0
    %1282 = vmatpush1.msra.mxu0 0.0
    %1283 = vmatprep.subr.mxu0 0.0
    %1284 = vmatpush1.msra.mxu0 0.0
    %1285 = vmatprep.subr.mxu0 0.0
    %1286 = vmatpush1.msra.mxu0 0.0
    %1287 = vmatprep.subr.mxu0 0.0
    %1288 = vmatpush1.msra.mxu0 0.0
    %1289 = vmatprep.subr.mxu0 0.0
    %1290 = vmatpush1.msra.mxu0 0.0
    %1291 = vmatprep.subr.mxu0 0.0
    %1292 = vmatpush1.msra.mxu0 0.0
    %1293 = vmatprep.mubr.f32.mxu0 0.0
    %1294 = vmatmul.mubr.f32.gmra.mrb[0].mxu0 %v1227
    %v1295 = vpop.f32.mrb[0].mxu0
    %v1296 = vadd.f32 0.0, %v1295
    %v1297 = vpop.f32.mrb[0].mxu0
    %1298 = vdwg.mxu0
    %1299 = vrot.lane.b32.xlu0 %v213, 48
    %v1300 = vpop.permute.xlu0 %1299
    %v1303 = vsel %vm225, %v1222, 0
    %1305 = vmatprep.subr.mxu0 0.0
    %1306 = vmatpush1.msra.mxu0 %v1300
    %1307 = vmatprep.subr.mxu0 0.0
    %1308 = vmatpush1.msra.mxu0 0.0
    %1309 = vmatprep.subr.mxu0 0.0
    %1310 = vmatpush1.msra.mxu0 0.0
    %1311 = vmatprep.subr.mxu0 0.0
    %1312 = vmatpush1.msra.mxu0 0.0
    %1313 = vmatprep.subr.mxu0 0.0
    %1314 = vmatpush1.msra.mxu0 0.0
    %1315 = vmatprep.subr.mxu0 0.0
    %1316 = vmatpush1.msra.mxu0 0.0
    %1317 = vmatprep.subr.mxu0 0.0
    %1318 = vmatpush1.msra.mxu0 0.0
    %1319 = vmatprep.subr.mxu0 0.0
    %1320 = vmatpush1.msra.mxu0 0.0
    %1321 = vmatprep.subr.mxu0 0.0
    %1322 = vmatpush1.msra.mxu0 0.0
    %1323 = vmatprep.subr.mxu0 0.0
    %1324 = vmatpush1.msra.mxu0 0.0
    %1325 = vmatprep.subr.mxu0 0.0
    %1326 = vmatpush1.msra.mxu0 0.0
    %1327 = vmatprep.subr.mxu0 0.0
    %1328 = vmatpush1.msra.mxu0 0.0
    %1329 = vmatprep.subr.mxu0 0.0
    %1330 = vmatpush1.msra.mxu0 0.0
    %1331 = vmatprep.subr.mxu0 0.0
    %1332 = vmatpush1.msra.mxu0 0.0
    %1333 = vmatprep.subr.mxu0 0.0
    %1334 = vmatpush1.msra.mxu0 0.0
    %1335 = vmatprep.subr.mxu0 0.0
    %1336 = vmatpush1.msra.mxu0 0.0
    %1337 = vmatprep.subr.mxu0 0.0
    %1338 = vmatpush1.msra.mxu0 0.0
    %1339 = vmatprep.subr.mxu0 0.0
    %1340 = vmatpush1.msra.mxu0 0.0
    %1341 = vmatprep.subr.mxu0 0.0
    %1342 = vmatpush1.msra.mxu0 0.0
    %1343 = vmatprep.subr.mxu0 0.0
    %1344 = vmatpush1.msra.mxu0 0.0
    %1345 = vmatprep.subr.mxu0 0.0
    %1346 = vmatpush1.msra.mxu0 0.0
    %1347 = vmatprep.subr.mxu0 0.0
    %1348 = vmatpush1.msra.mxu0 0.0
    %1349 = vmatprep.subr.mxu0 0.0
    %1350 = vmatpush1.msra.mxu0 0.0
    %1351 = vmatprep.subr.mxu0 0.0
    %1352 = vmatpush1.msra.mxu0 0.0
    %1353 = vmatprep.subr.mxu0 0.0
    %1354 = vmatpush1.msra.mxu0 0.0
    %1355 = vmatprep.subr.mxu0 0.0
    %1356 = vmatpush1.msra.mxu0 0.0
    %1357 = vmatprep.subr.mxu0 0.0
    %1358 = vmatpush1.msra.mxu0 0.0
    %1359 = vmatprep.subr.mxu0 0.0
    %1360 = vmatpush1.msra.mxu0 0.0
    %1361 = vmatprep.subr.mxu0 0.0
    %1362 = vmatpush1.msra.mxu0 0.0
    %1363 = vmatprep.subr.mxu0 0.0
    %1364 = vmatpush1.msra.mxu0 0.0
    %1365 = vmatprep.subr.mxu0 0.0
    %1366 = vmatpush1.msra.mxu0 0.0
    %1367 = vmatprep.subr.mxu0 0.0
    %1368 = vmatpush1.msra.mxu0 0.0
    %1369 = vmatprep.mubr.f32.mxu0 0.0
    %1370 = vmatmul.mubr.f32.gmra.mrb[0].mxu0 %v1303
    %v1371 = vpop.f32.mrb[0].mxu0
    %v1372 = vadd.f32 0.0, %v1371
    %v1373 = vpop.f32.mrb[0].mxu0
    %1374 = vdwg.mxu0
    %v1376 = vsel %vm225, %v1296, 0
    %v1379 = vsel %vm225, %v1372, 0
    %1381 = vmatprep.subr.mxu0 0.0
    %1382 = vmatpush1.msra.mxu0 %v220
    %1383 = vmatprep.subr.mxu0 0.0
    %1384 = vmatpush1.msra.mxu0 0.0
    %1385 = vmatprep.subr.mxu0 0.0
    %1386 = vmatpush1.msra.mxu0 0.0
    %1387 = vmatprep.subr.mxu0 0.0
    %1388 = vmatpush1.msra.mxu0 0.0
    %1389 = vmatprep.subr.mxu0 0.0
    %1390 = vmatpush1.msra.mxu0 0.0
    %1391 = vmatprep.subr.mxu0 0.0
    %1392 = vmatpush1.msra.mxu0 0.0
    %1393 = vmatprep.subr.mxu0 0.0
    %1394 = vmatpush1.msra.mxu0 0.0
    %1395 = vmatprep.subr.mxu0 0.0
    %1396 = vmatpush1.msra.mxu0 0.0
    %1397 = vmatprep.subr.mxu0 0.0
    %1398 = vmatpush1.msra.mxu0 0.0
    %1399 = vmatprep.subr.mxu0 0.0
    %1400 = vmatpush1.msra.mxu0 0.0
    %1401 = vmatprep.subr.mxu0 0.0
    %1402 = vmatpush1.msra.mxu0 0.0
    %1403 = vmatprep.subr.mxu0 0.0
    %1404 = vmatpush1.msra.mxu0 0.0
    %1405 = vmatprep.subr.mxu0 0.0
    %1406 = vmatpush1.msra.mxu0 0.0
    %1407 = vmatprep.subr.mxu0 0.0
    %1408 = vmatpush1.msra.mxu0 0.0
    %1409 = vmatprep.subr.mxu0 0.0
    %1410 = vmatpush1.msra.mxu0 0.0
    %1411 = vmatprep.subr.mxu0 0.0
    %1412 = vmatpush1.msra.mxu0 0.0
    %1413 = vmatprep.subr.mxu0 0.0
    %1414 = vmatpush1.msra.mxu0 0.0
    %1415 = vmatprep.subr.mxu0 0.0
    %1416 = vmatpush1.msra.mxu0 0.0
    %1417 = vmatprep.subr.mxu0 0.0
    %1418 = vmatpush1.msra.mxu0 0.0
    %1419 = vmatprep.subr.mxu0 0.0
    %1420 = vmatpush1.msra.mxu0 0.0
    %1421 = vmatprep.subr.mxu0 0.0
    %1422 = vmatpush1.msra.mxu0 0.0
    %1423 = vmatprep.subr.mxu0 0.0
    %1424 = vmatpush1.msra.mxu0 0.0
    %1425 = vmatprep.subr.mxu0 0.0
    %1426 = vmatpush1.msra.mxu0 0.0
    %1427 = vmatprep.subr.mxu0 0.0
    %1428 = vmatpush1.msra.mxu0 0.0
    %1429 = vmatprep.subr.mxu0 0.0
    %1430 = vmatpush1.msra.mxu0 0.0
    %1431 = vmatprep.subr.mxu0 0.0
    %1432 = vmatpush1.msra.mxu0 0.0
    %1433 = vmatprep.subr.mxu0 0.0
    %1434 = vmatpush1.msra.mxu0 0.0
    %1435 = vmatprep.subr.mxu0 0.0
    %1436 = vmatpush1.msra.mxu0 0.0
    %1437 = vmatprep.subr.mxu0 0.0
    %1438 = vmatpush1.msra.mxu0 0.0
    %1439 = vmatprep.subr.mxu0 0.0
    %1440 = vmatpush1.msra.mxu0 0.0
    %1441 = vmatprep.subr.mxu0 0.0
    %1442 = vmatpush1.msra.mxu0 0.0
    %1443 = vmatprep.subr.mxu0 0.0
    %1444 = vmatpush1.msra.mxu0 0.0
    %1445 = vmatprep.mubr.f32.mxu0 0.0
    %1446 = vmatmul.mubr.f32.gmra.mrb[0].mxu0 %v1376
    %v1447 = vpop.f32.mrb[0].mxu0
    %v1448 = vadd.f32 0.0, %v1447
    %v1449 = vpop.f32.mrb[0].mxu0
    %1450 = vmatprep.mubr.f32.mxu0 0.0
    %1451 = vmatmul.mubr.f32.gmra.mrb[0].mxu0 %v1379
    %v1452 = vpop.f32.mrb[0].mxu0
    %v1453 = vadd.f32 0.0, %v1452
    %v1454 = vpop.f32.mrb[0].mxu0
    %1455 = vdwg.mxu0
    %v1456 = vadd.f32 %v1037, %v1448
    %v1457 = vadd.f32 %v1042, %v1453
    %1458 = vrot.lane.b32.xlu0 %v216, 104
    %v1459 = vpop.permute.xlu0 %1458
    %1460 = vrot.lane.b32.xlu0 %v208, 72
    %v1461 = vpop.permute.xlu0 %1460
    %v1462 = vsel %vm225, %v1459, 0
    %v1464 = vsel %vm225, %v1461, 0
    %1466 = vmatprep.subr.mxu0 0.0
    %1467 = vmatpush1.xpose.msra.mxu0 %v1464
    %1468 = vmatprep.subr.mxu0 0.0
    %1469 = vmatpush1.xpose.msra.mxu0 0.0
    %1470 = vmatprep.subr.mxu0 0.0
    %1471 = vmatpush1.xpose.msra.mxu0 0.0
    %1472 = vmatprep.subr.mxu0 0.0
    %1473 = vmatpush1.xpose.msra.mxu0 0.0
    %1474 = vmatprep.subr.mxu0 0.0
    %1475 = vmatpush1.xpose.msra.mxu0 0.0
    %1476 = vmatprep.subr.mxu0 0.0
    %1477 = vmatpush1.xpose.msra.mxu0 0.0
    %1478 = vmatprep.subr.mxu0 0.0
    %1479 = vmatpush1.xpose.msra.mxu0 0.0
    %1480 = vmatprep.subr.mxu0 0.0
    %1481 = vmatpush1.xpose.msra.mxu0 0.0
    %1482 = vmatprep.subr.mxu0 0.0
    %1483 = vmatpush1.xpose.msra.mxu0 0.0
    %1484 = vmatprep.subr.mxu0 0.0
    %1485 = vmatpush1.xpose.msra.mxu0 0.0
    %1486 = vmatprep.subr.mxu0 0.0
    %1487 = vmatpush1.xpose.msra.mxu0 0.0
    %1488 = vmatprep.subr.mxu0 0.0
    %1489 = vmatpush1.xpose.msra.mxu0 0.0
    %1490 = vmatprep.subr.mxu0 0.0
    %1491 = vmatpush1.xpose.msra.mxu0 0.0
    %1492 = vmatprep.subr.mxu0 0.0
    %1493 = vmatpush1.xpose.msra.mxu0 0.0
    %1494 = vmatprep.subr.mxu0 0.0
    %1495 = vmatpush1.xpose.msra.mxu0 0.0
    %1496 = vmatprep.subr.mxu0 0.0
    %1497 = vmatpush1.xpose.msra.mxu0 0.0
    %1498 = vmatprep.subr.mxu0 0.0
    %1499 = vmatpush1.xpose.msra.mxu0 0.0
    %1500 = vmatprep.subr.mxu0 0.0
    %1501 = vmatpush1.xpose.msra.mxu0 0.0
    %1502 = vmatprep.subr.mxu0 0.0
    %1503 = vmatpush1.xpose.msra.mxu0 0.0
    %1504 = vmatprep.subr.mxu0 0.0
    %1505 = vmatpush1.xpose.msra.mxu0 0.0
    %1506 = vmatprep.subr.mxu0 0.0
    %1507 = vmatpush1.xpose.msra.mxu0 0.0
    %1508 = vmatprep.subr.mxu0 0.0
    %1509 = vmatpush1.xpose.msra.mxu0 0.0
    %1510 = vmatprep.subr.mxu0 0.0
    %1511 = vmatpush1.xpose.msra.mxu0 0.0
    %1512 = vmatprep.subr.mxu0 0.0
    %1513 = vmatpush1.xpose.msra.mxu0 0.0
    %1514 = vmatprep.subr.mxu0 0.0
    %1515 = vmatpush1.xpose.msra.mxu0 0.0
    %1516 = vmatprep.subr.mxu0 0.0
    %1517 = vmatpush1.xpose.msra.mxu0 0.0
    %1518 = vmatprep.subr.mxu0 0.0
    %1519 = vmatpush1.xpose.msra.mxu0 0.0
    %1520 = vmatprep.subr.mxu0 0.0
    %1521 = vmatpush1.xpose.msra.mxu0 0.0
    %1522 = vmatprep.subr.mxu0 0.0
    %1523 = vmatpush1.xpose.msra.mxu0 0.0
    %1524 = vmatprep.subr.mxu0 0.0
    %1525 = vmatpush1.xpose.msra.mxu0 0.0
    %1526 = vmatprep.subr.mxu0 0.0
    %1527 = vmatpush1.xpose.msra.mxu0 0.0
    %1528 = vmatprep.subr.mxu0 0.0
    %1529 = vmatpush1.xpose.msra.mxu0 0.0
    %1530 = vmatprep.mubr.f32.mxu0 0.0
    %1531 = vmatmul.mubr.f32.gmra.mrb[0].mxu0 %v1462
    %v1532 = vpop.f32.mrb[0].mxu0
    %v1533 = vadd.f32 0.0, %v1532
    %v1534 = vpop.f32.mrb[0].mxu0
    %1535 = vdwg.mxu0
    %1536 = vrot.lane.b32.xlu0 %v217, 104
    %v1537 = vpop.permute.xlu0 %1536
    %1538 = vrot.lane.b32.xlu0 %v213, 72
    %v1539 = vpop.permute.xlu0 %1538
    %v1540 = vsel %vm225, %v1537, 0
    %v1542 = vsel %vm225, %v1539, 0
    %1544 = vmatprep.subr.mxu0 0.0
    %1545 = vmatpush1.xpose.msra.mxu0 %v1542
    %1546 = vmatprep.subr.mxu0 0.0
    %1547 = vmatpush1.xpose.msra.mxu0 0.0
    %1548 = vmatprep.subr.mxu0 0.0
    %1549 = vmatpush1.xpose.msra.mxu0 0.0
    %1550 = vmatprep.subr.mxu0 0.0
    %1551 = vmatpush1.xpose.msra.mxu0 0.0
    %1552 = vmatprep.subr.mxu0 0.0
    %1553 = vmatpush1.xpose.msra.mxu0 0.0
    %1554 = vmatprep.subr.mxu0 0.0
    %1555 = vmatpush1.xpose.msra.mxu0 0.0
    %1556 = vmatprep.subr.mxu0 0.0
    %1557 = vmatpush1.xpose.msra.mxu0 0.0
    %1558 = vmatprep.subr.mxu0 0.0
    %1559 = vmatpush1.xpose.msra.mxu0 0.0
    %1560 = vmatprep.subr.mxu0 0.0
    %1561 = vmatpush1.xpose.msra.mxu0 0.0
    %1562 = vmatprep.subr.mxu0 0.0
    %1563 = vmatpush1.xpose.msra.mxu0 0.0
    %1564 = vmatprep.subr.mxu0 0.0
    %1565 = vmatpush1.xpose.msra.mxu0 0.0
    %1566 = vmatprep.subr.mxu0 0.0
    %1567 = vmatpush1.xpose.msra.mxu0 0.0
    %1568 = vmatprep.subr.mxu0 0.0
    %1569 = vmatpush1.xpose.msra.mxu0 0.0
    %1570 = vmatprep.subr.mxu0 0.0
    %1571 = vmatpush1.xpose.msra.mxu0 0.0
    %1572 = vmatprep.subr.mxu0 0.0
    %1573 = vmatpush1.xpose.msra.mxu0 0.0
    %1574 = vmatprep.subr.mxu0 0.0
    %1575 = vmatpush1.xpose.msra.mxu0 0.0
    %1576 = vmatprep.subr.mxu0 0.0
    %1577 = vmatpush1.xpose.msra.mxu0 0.0
    %1578 = vmatprep.subr.mxu0 0.0
    %1579 = vmatpush1.xpose.msra.mxu0 0.0
    %1580 = vmatprep.subr.mxu0 0.0
    %1581 = vmatpush1.xpose.msra.mxu0 0.0
    %1582 = vmatprep.subr.mxu0 0.0
    %1583 = vmatpush1.xpose.msra.mxu0 0.0
    %1584 = vmatprep.subr.mxu0 0.0
    %1585 = vmatpush1.xpose.msra.mxu0 0.0
    %1586 = vmatprep.subr.mxu0 0.0
    %1587 = vmatpush1.xpose.msra.mxu0 0.0
    %1588 = vmatprep.subr.mxu0 0.0
    %1589 = vmatpush1.xpose.msra.mxu0 0.0
    %1590 = vmatprep.subr.mxu0 0.0
    %1591 = vmatpush1.xpose.msra.mxu0 0.0
    %1592 = vmatprep.subr.mxu0 0.0
    %1593 = vmatpush1.xpose.msra.mxu0 0.0
    %1594 = vmatprep.subr.mxu0 0.0
    %1595 = vmatpush1.xpose.msra.mxu0 0.0
    %1596 = vmatprep.subr.mxu0 0.0
    %1597 = vmatpush1.xpose.msra.mxu0 0.0
    %1598 = vmatprep.subr.mxu0 0.0
    %1599 = vmatpush1.xpose.msra.mxu0 0.0
    %1600 = vmatprep.subr.mxu0 0.0
    %1601 = vmatpush1.xpose.msra.mxu0 0.0
    %1602 = vmatprep.subr.mxu0 0.0
    %1603 = vmatpush1.xpose.msra.mxu0 0.0
    %1604 = vmatprep.subr.mxu0 0.0
    %1605 = vmatpush1.xpose.msra.mxu0 0.0
    %1606 = vmatprep.subr.mxu0 0.0
    %1607 = vmatpush1.xpose.msra.mxu0 0.0
    %1608 = vmatprep.mubr.f32.mxu0 0.0
    %1609 = vmatmul.mubr.f32.gmra.mrb[0].mxu0 %v1540
    %v1610 = vpop.f32.mrb[0].mxu0
    %v1611 = vadd.f32 0.0, %v1610
    %v1612 = vpop.f32.mrb[0].mxu0
    %1613 = vdwg.mxu0
    %v1614 = vsel %vm225, %v1533, -inf
    %1615 = vmax.xlane.f32.xlu0 %v1614
    %v1616 = vpop.xlane.xlu0 %1615
    %v1617 = vsel %vm225, %v1611, -inf
    %1618 = vmax.xlane.f32.xlu0 %v1617
    %v1619 = vpop.xlane.xlu0 %1618
    %v1620 = vsub.f32 %v1533, %v1616
    %v1621 = vsub.f32 %v1611, %v1619
    %v1622 = vmul.f32 %v1620, 1.442695
    %v1623 = vpow.pop %v1622
    %v1624 = vmul.f32 %v1621, 1.442695
    %v1625 = vpow.pop %v1624
    %v1626 = vsel %vm225, %v1623, 0.0
    %1627 = vadd.xlane.f32.xlu0 %v1626
    %v1628 = vpop.xlane.xlu0 %1627
    %v1629 = vsel %vm225, %v1625, 0.0
    %1630 = vadd.xlane.f32.xlu0 %v1629
    %v1631 = vpop.xlane.xlu0 %1630
    %v1632 = vrcp.pop %v1628
    %v1633 = vrcp.pop %v1631
    %v1634 = vmul.f32 %v1623, %v1632
    %v1635 = vmul.f32 %v1625, %v1633
    %1636 = vrot.lane.b32.xlu0 %v208, 40
    %v1637 = vpop.permute.xlu0 %1636
    %v1640 = vsel %vm225, %v1634, 0
    %1642 = vmatprep.subr.mxu0 0.0
    %1643 = vmatpush1.msra.mxu0 %v1637
    %1644 = vmatprep.subr.mxu0 0.0
    %1645 = vmatpush1.msra.mxu0 0.0
    %1646 = vmatprep.subr.mxu0 0.0
    %1647 = vmatpush1.msra.mxu0 0.0
    %1648 = vmatprep.subr.mxu0 0.0
    %1649 = vmatpush1.msra.mxu0 0.0
    %1650 = vmatprep.subr.mxu0 0.0
    %1651 = vmatpush1.msra.mxu0 0.0
    %1652 = vmatprep.subr.mxu0 0.0
    %1653 = vmatpush1.msra.mxu0 0.0
    %1654 = vmatprep.subr.mxu0 0.0
    %1655 = vmatpush1.msra.mxu0 0.0
    %1656 = vmatprep.subr.mxu0 0.0
    %1657 = vmatpush1.msra.mxu0 0.0
    %1658 = vmatprep.subr.mxu0 0.0
    %1659 = vmatpush1.msra.mxu0 0.0
    %1660 = vmatprep.subr.mxu0 0.0
    %1661 = vmatpush1.msra.mxu0 0.0
    %1662 = vmatprep.subr.mxu0 0.0
    %1663 = vmatpush1.msra.mxu0 0.0
    %1664 = vmatprep.subr.mxu0 0.0
    %1665 = vmatpush1.msra.mxu0 0.0
    %1666 = vmatprep.subr.mxu0 0.0
    %1667 = vmatpush1.msra.mxu0 0.0
    %1668 = vmatprep.subr.mxu0 0.0
    %1669 = vmatpush1.msra.mxu0 0.0
    %1670 = vmatprep.subr.mxu0 0.0
    %1671 = vmatpush1.msra.mxu0 0.0
    %1672 = vmatprep.subr.mxu0 0.0
    %1673 = vmatpush1.msra.mxu0 0.0
    %1674 = vmatprep.subr.mxu0 0.0
    %1675 = vmatpush1.msra.mxu0 0.0
    %1676 = vmatprep.subr.mxu0 0.0
    %1677 = vmatpush1.msra.mxu0 0.0
    %1678 = vmatprep.subr.mxu0 0.0
    %1679 = vmatpush1.msra.mxu0 0.0
    %1680 = vmatprep.subr.mxu0 0.0
    %1681 = vmatpush1.msra.mxu0 0.0
    %1682 = vmatprep.subr.mxu0 0.0
    %1683 = vmatpush1.msra.mxu0 0.0
    %1684 = vmatprep.subr.mxu0 0.0
    %1685 = vmatpush1.msra.mxu0 0.0
    %1686 = vmatprep.subr.mxu0 0.0
    %1687 = vmatpush1.msra.mxu0 0.0
    %1688 = vmatprep.subr.mxu0 0.0
    %1689 = vmatpush1.msra.mxu0 0.0
    %1690 = vmatprep.subr.mxu0 0.0
    %1691 = vmatpush1.msra.mxu0 0.0
    %1692 = vmatprep.subr.mxu0 0.0
    %1693 = vmatpush1.msra.mxu0 0.0
    %1694 = vmatprep.subr.mxu0 0.0
    %1695 = vmatpush1.msra.mxu0 0.0
    %1696 = vmatprep.subr.mxu0 0.0
    %1697 = vmatpush1.msra.mxu0 0.0
    %1698 = vmatprep.subr.mxu0 0.0
    %1699 = vmatpush1.msra.mxu0 0.0
    %1700 = vmatprep.subr.mxu0 0.0
    %1701 = vmatpush1.msra.mxu0 0.0
    %1702 = vmatprep.subr.mxu0 0.0
    %1703 = vmatpush1.msra.mxu0 0.0
    %1704 = vmatprep.subr.mxu0 0.0
    %1705 = vmatpush1.msra.mxu0 0.0
    %1706 = vmatprep.mubr.f32.mxu0 0.0
    %1707 = vmatmul.mubr.f32.gmra.mrb[0].mxu0 %v1640
    %v1708 = vpop.f32.mrb[0].mxu0
    %v1709 = vadd.f32 0.0, %v1708
    %v1710 = vpop.f32.mrb[0].mxu0
    %1711 = vdwg.mxu0
    %1712 = vrot.lane.b32.xlu0 %v213, 40
    %v1713 = vpop.permute.xlu0 %1712
    %v1716 = vsel %vm225, %v1635, 0
    %1718 = vmatprep.subr.mxu0 0.0
    %1719 = vmatpush1.msra.mxu0 %v1713
    %1720 = vmatprep.subr.mxu0 0.0
    %1721 = vmatpush1.msra.mxu0 0.0
    %1722 = vmatprep.subr.mxu0 0.0
    %1723 = vmatpush1.msra.mxu0 0.0
    %1724 = vmatprep.subr.mxu0 0.0
    %1725 = vmatpush1.msra.mxu0 0.0
    %1726 = vmatprep.subr.mxu0 0.0
    %1727 = vmatpush1.msra.mxu0 0.0
    %1728 = vmatprep.subr.mxu0 0.0
    %1729 = vmatpush1.msra.mxu0 0.0
    %1730 = vmatprep.subr.mxu0 0.0
    %1731 = vmatpush1.msra.mxu0 0.0
    %1732 = vmatprep.subr.mxu0 0.0
    %1733 = vmatpush1.msra.mxu0 0.0
    %1734 = vmatprep.subr.mxu0 0.0
    %1735 = vmatpush1.msra.mxu0 0.0
    %1736 = vmatprep.subr.mxu0 0.0
    %1737 = vmatpush1.msra.mxu0 0.0
    %1738 = vmatprep.subr.mxu0 0.0
    %1739 = vmatpush1.msra.mxu0 0.0
    %1740 = vmatprep.subr.mxu0 0.0
    %1741 = vmatpush1.msra.mxu0 0.0
    %1742 = vmatprep.subr.mxu0 0.0
    %1743 = vmatpush1.msra.mxu0 0.0
    %1744 = vmatprep.subr.mxu0 0.0
    %1745 = vmatpush1.msra.mxu0 0.0
    %1746 = vmatprep.subr.mxu0 0.0
    %1747 = vmatpush1.msra.mxu0 0.0
    %1748 = vmatprep.subr.mxu0 0.0
    %1749 = vmatpush1.msra.mxu0 0.0
    %1750 = vmatprep.subr.mxu0 0.0
    %1751 = vmatpush1.msra.mxu0 0.0
    %1752 = vmatprep.subr.mxu0 0.0
    %1753 = vmatpush1.msra.mxu0 0.0
    %1754 = vmatprep.subr.mxu0 0.0
    %1755 = vmatpush1.msra.mxu0 0.0
    %1756 = vmatprep.subr.mxu0 0.0
    %1757 = vmatpush1.msra.mxu0 0.0
    %1758 = vmatprep.subr.mxu0 0.0
    %1759 = vmatpush1.msra.mxu0 0.0
    %1760 = vmatprep.subr.mxu0 0.0
    %1761 = vmatpush1.msra.mxu0 0.0
    %1762 = vmatprep.subr.mxu0 0.0
    %1763 = vmatpush1.msra.mxu0 0.0
    %1764 = vmatprep.subr.mxu0 0.0
    %1765 = vmatpush1.msra.mxu0 0.0
    %1766 = vmatprep.subr.mxu0 0.0
    %1767 = vmatpush1.msra.mxu0 0.0
    %1768 = vmatprep.subr.mxu0 0.0
    %1769 = vmatpush1.msra.mxu0 0.0
    %1770 = vmatprep.subr.mxu0 0.0
    %1771 = vmatpush1.msra.mxu0 0.0
    %1772 = vmatprep.subr.mxu0 0.0
    %1773 = vmatpush1.msra.mxu0 0.0
    %1774 = vmatprep.subr.mxu0 0.0
    %1775 = vmatpush1.msra.mxu0 0.0
    %1776 = vmatprep.subr.mxu0 0.0
    %1777 = vmatpush1.msra.mxu0 0.0
    %1778 = vmatprep.subr.mxu0 0.0
    %1779 = vmatpush1.msra.mxu0 0.0
    %1780 = vmatprep.subr.mxu0 0.0
    %1781 = vmatpush1.msra.mxu0 0.0
    %1782 = vmatprep.mubr.f32.mxu0 0.0
    %1783 = vmatmul.mubr.f32.gmra.mrb[0].mxu0 %v1716
    %v1784 = vpop.f32.mrb[0].mxu0
    %v1785 = vadd.f32 0.0, %v1784
    %v1786 = vpop.f32.mrb[0].mxu0
    %1787 = vdwg.mxu0
    %v1789 = vsel %vm225, %v1709, 0
    %v1792 = vsel %vm225, %v1785, 0
    %1794 = vmatprep.subr.mxu0 0.0
    %1795 = vmatpush1.msra.mxu0 %v221
    %1796 = vmatprep.subr.mxu0 0.0
    %1797 = vmatpush1.msra.mxu0 0.0
    %1798 = vmatprep.subr.mxu0 0.0
    %1799 = vmatpush1.msra.mxu0 0.0
    %1800 = vmatprep.subr.mxu0 0.0
    %1801 = vmatpush1.msra.mxu0 0.0
    %1802 = vmatprep.subr.mxu0 0.0
    %1803 = vmatpush1.msra.mxu0 0.0
    %1804 = vmatprep.subr.mxu0 0.0
    %1805 = vmatpush1.msra.mxu0 0.0
    %1806 = vmatprep.subr.mxu0 0.0
    %1807 = vmatpush1.msra.mxu0 0.0
    %1808 = vmatprep.subr.mxu0 0.0
    %1809 = vmatpush1.msra.mxu0 0.0
    %1810 = vmatprep.subr.mxu0 0.0
    %1811 = vmatpush1.msra.mxu0 0.0
    %1812 = vmatprep.subr.mxu0 0.0
    %1813 = vmatpush1.msra.mxu0 0.0
    %1814 = vmatprep.subr.mxu0 0.0
    %1815 = vmatpush1.msra.mxu0 0.0
    %1816 = vmatprep.subr.mxu0 0.0
    %1817 = vmatpush1.msra.mxu0 0.0
    %1818 = vmatprep.subr.mxu0 0.0
    %1819 = vmatpush1.msra.mxu0 0.0
    %1820 = vmatprep.subr.mxu0 0.0
    %1821 = vmatpush1.msra.mxu0 0.0
    %1822 = vmatprep.subr.mxu0 0.0
    %1823 = vmatpush1.msra.mxu0 0.0
    %1824 = vmatprep.subr.mxu0 0.0
    %1825 = vmatpush1.msra.mxu0 0.0
    %1826 = vmatprep.subr.mxu0 0.0
    %1827 = vmatpush1.msra.mxu0 0.0
    %1828 = vmatprep.subr.mxu0 0.0
    %1829 = vmatpush1.msra.mxu0 0.0
    %1830 = vmatprep.subr.mxu0 0.0
    %1831 = vmatpush1.msra.mxu0 0.0
    %1832 = vmatprep.subr.mxu0 0.0
    %1833 = vmatpush1.msra.mxu0 0.0
    %1834 = vmatprep.subr.mxu0 0.0
    %1835 = vmatpush1.msra.mxu0 0.0
    %1836 = vmatprep.subr.mxu0 0.0
    %1837 = vmatpush1.msra.mxu0 0.0
    %1838 = vmatprep.subr.mxu0 0.0
    %1839 = vmatpush1.msra.mxu0 0.0
    %1840 = vmatprep.subr.mxu0 0.0
    %1841 = vmatpush1.msra.mxu0 0.0
    %1842 = vmatprep.subr.mxu0 0.0
    %1843 = vmatpush1.msra.mxu0 0.0
    %1844 = vmatprep.subr.mxu0 0.0
    %1845 = vmatpush1.msra.mxu0 0.0
    %1846 = vmatprep.subr.mxu0 0.0
    %1847 = vmatpush1.msra.mxu0 0.0
    %1848 = vmatprep.subr.mxu0 0.0
    %1849 = vmatpush1.msra.mxu0 0.0
    %1850 = vmatprep.subr.mxu0 0.0
    %1851 = vmatpush1.msra.mxu0 0.0
    %1852 = vmatprep.subr.mxu0 0.0
    %1853 = vmatpush1.msra.mxu0 0.0
    %1854 = vmatprep.subr.mxu0 0.0
    %1855 = vmatpush1.msra.mxu0 0.0
    %1856 = vmatprep.subr.mxu0 0.0
    %1857 = vmatpush1.msra.mxu0 0.0
    %1858 = vmatprep.mubr.f32.mxu0 0.0
    %1859 = vmatmul.mubr.f32.gmra.mrb[0].mxu0 %v1789
    %v1860 = vpop.f32.mrb[0].mxu0
    %v1861 = vadd.f32 0.0, %v1860
    %v1862 = vpop.f32.mrb[0].mxu0
    %1863 = vmatprep.mubr.f32.mxu0 0.0
    %1864 = vmatmul.mubr.f32.gmra.mrb[0].mxu0 %v1792
    %v1865 = vpop.f32.mrb[0].mxu0
    %v1866 = vadd.f32 0.0, %v1865
    %v1867 = vpop.f32.mrb[0].mxu0
    %1868 = vdwg.mxu0
    %v1869 = vadd.f32 %v1456, %v1861
    %v1870 = vadd.f32 %v1457, %v1866
    %v1871 = vadd.f32 %v63, %v1869
    %v1872 = vadd.f32 %v64, %v1870
    %v1873 = vld [vmem:[%s6] sm:$0x1]
    %v1875 = vlaneseq
    %v1876 = vshrl.u32 %v1875, 7
    %v1877 = vsub.s32 0, %v1876
    %v1878 = vrot.slane %v1873, %v1877
    %v1880 = vadd.f32 %v1871, %v1878
    %v1881 = vadd.f32 %v1872, %v1878
    %v1882 = vld [vmem:[%s7] sm:$0x1]
    %v1883 = vld [vmem:[%s8] sm:$0x1]
    %v1884 = vsel %vm67, %v1880, 0.0
    %1885 = vadd.xlane.f32.xlu0 %v1884
    %v1886 = vpop.xlane.xlu0 %1885
    %v1887 = vsel %vm67, %v1881, 0.0
    %1888 = vadd.xlane.f32.xlu0 %v1887
    %v1889 = vpop.xlane.xlu0 %1888
    %v1890 = vmul.f32 %v1886, 0.03125
    %v1891 = vmul.f32 %v1889, 0.03125
    %v1892 = vsub.f32 %v1880, %v1890
    %v1893 = vsub.f32 %v1881, %v1891
    %v1894 = vmul.f32 %v1892, %v1892
    %v1895 = vmul.f32 %v1893, %v1893
    %v1896 = vsel %vm67, %v1894, 0.0
    %1897 = vadd.xlane.f32.xlu0 %v1896
    %v1898 = vpop.xlane.xlu0 %1897
    %v1899 = vsel %vm67, %v1895, 0.0
    %1900 = vadd.xlane.f32.xlu0 %v1899
    %v1901 = vpop.xlane.xlu0 %1900
    %v1902 = vmul.f32 %v1898, 0.032258064
    %v1903 = vmul.f32 %v1901, 0.032258064
    %v1904 = vrsqrt.pop %v1902
    %v1905 = vmul.f32 %v1902, %v1904
    %vm1906 = vcmp.eq.f32.partialorder %v1902, inf
    %v1907 = vsel %vm1906, %v1902, %v1905
    %vm1908 = vcmp.eq.f32.partialorder %v1902, 0.0
    %v1909 = vand.u32 %v1902, 2147483648
    %v1910 = vsel %vm1908, %v1909, %v1907
    %v1911 = vrsqrt.pop %v1903
    %v1912 = vmul.f32 %v1903, %v1911
    %vm1913 = vcmp.eq.f32.partialorder %v1903, inf
    %v1914 = vsel %vm1913, %v1903, %v1912
    %vm1915 = vcmp.eq.f32.partialorder %v1903, 0.0
    %v1916 = vand.u32 %v1903, 2147483648
    %v1917 = vsel %vm1915, %v1916, %v1914
    %v1918 = vadd.f32 %v1910, 1e-06
    %v1919 = vadd.f32 %v1917, 1e-06
    %v1920 = vrcp.pop %v1918
    %v1921 = vrcp.pop %v1919
    %v1923 = vlaneseq
    %v1924 = vshrl.u32 %v1923, 7
    %v1925 = vsub.s32 0, %v1924
    %v1926 = vrot.slane %v1882, %v1925
    %v1928 = vmul.f32 %v1926, %v1892
    %v1929 = vmul.f32 %v1926, %v1893
    %v1930 = vmul.f32 %v1928, %v1920
    %v1931 = vmul.f32 %v1929, %v1921
    %v1933 = vlaneseq
    %v1934 = vshrl.u32 %v1933, 7
    %v1935 = vsub.s32 0, %v1934
    %v1936 = vrot.slane %v1883, %v1935
    %v1938 = vadd.f32 %v1930, %v1936
    %v1939 = vadd.f32 %v1931, %v1936
    %v1940 = vld [vmem:[%s9] sm:$0xff]
    %v1941 = vld [vmem:[%s9 + $0x8] sm:$0xff]
    %v1942 = vld [vmem:[%s9 + $0x10] sm:$0xff]
    %v1943 = vld [vmem:[%s9 + $0x18] sm:$0xff]
    %v1944 = vld [vmem:[%s10] sm:$0x1]
    %v1946 = vlaneseq
    %v1947 = vshrl.u32 %v1946, 7
    %v1948 = vsub.s32 0, %v1947
    %v1949 = vrot.slane %v1944, %v1948
    %v1952 = vsel %vm67, %v1938, 0
    %v1955 = vsel %vm67, %v1939, 0
    %1957 = vmatprep.subr.mxu0 0.0
    %1958 = vmatpush1.msra.mxu0 %v1940
    %1959 = vmatprep.subr.mxu0 0.0
    %1960 = vmatpush1.msra.mxu0 %v1941
    %1961 = vmatprep.subr.mxu0 0.0
    %1962 = vmatpush1.msra.mxu0 %v1942
    %1963 = vmatprep.subr.mxu0 0.0
    %1964 = vmatpush1.msra.mxu0 %v1943
    %1965 = vmatprep.subr.mxu0 0.0
    %1966 = vmatpush1.msra.mxu0 0.0
    %1967 = vmatprep.subr.mxu0 0.0
    %1968 = vmatpush1.msra.mxu0 0.0
    %1969 = vmatprep.subr.mxu0 0.0
    %1970 = vmatpush1.msra.mxu0 0.0
    %1971 = vmatprep.subr.mxu0 0.0
    %1972 = vmatpush1.msra.mxu0 0.0
    %1973 = vmatprep.subr.mxu0 0.0
    %1974 = vmatpush1.msra.mxu0 0.0
    %1975 = vmatprep.subr.mxu0 0.0
    %1976 = vmatpush1.msra.mxu0 0.0
    %1977 = vmatprep.subr.mxu0 0.0
    %1978 = vmatpush1.msra.mxu0 0.0
    %1979 = vmatprep.subr.mxu0 0.0
    %1980 = vmatpush1.msra.mxu0 0.0
    %1981 = vmatprep.subr.mxu0 0.0
    %1982 = vmatpush1.msra.mxu0 0.0
    %1983 = vmatprep.subr.mxu0 0.0
    %1984 = vmatpush1.msra.mxu0 0.0
    %1985 = vmatprep.subr.mxu0 0.0
    %1986 = vmatpush1.msra.mxu0 0.0
    %1987 = vmatprep.subr.mxu0 0.0
    %1988 = vmatpush1.msra.mxu0 0.0
    %1989 = vmatprep.subr.mxu0 0.0
    %1990 = vmatpush1.msra.mxu0 0.0
    %1991 = vmatprep.subr.mxu0 0.0
    %1992 = vmatpush1.msra.mxu0 0.0
    %1993 = vmatprep.subr.mxu0 0.0
    %1994 = vmatpush1.msra.mxu0 0.0
    %1995 = vmatprep.subr.mxu0 0.0
    %1996 = vmatpush1.msra.mxu0 0.0
    %1997 = vmatprep.subr.mxu0 0.0
    %1998 = vmatpush1.msra.mxu0 0.0
    %1999 = vmatprep.subr.mxu0 0.0
    %2000 = vmatpush1.msra.mxu0 0.0
    %2001 = vmatprep.subr.mxu0 0.0
    %2002 = vmatpush1.msra.mxu0 0.0
    %2003 = vmatprep.subr.mxu0 0.0
    %2004 = vmatpush1.msra.mxu0 0.0
    %2005 = vmatprep.subr.mxu0 0.0
    %2006 = vmatpush1.msra.mxu0 0.0
    %2007 = vmatprep.subr.mxu0 0.0
    %2008 = vmatpush1.msra.mxu0 0.0
    %2009 = vmatprep.subr.mxu0 0.0
    %2010 = vmatpush1.msra.mxu0 0.0
    %2011 = vmatprep.subr.mxu0 0.0
    %2012 = vmatpush1.msra.mxu0 0.0
    %2013 = vmatprep.subr.mxu0 0.0
    %2014 = vmatpush1.msra.mxu0 0.0
    %2015 = vmatprep.subr.mxu0 0.0
    %2016 = vmatpush1.msra.mxu0 0.0
    %2017 = vmatprep.subr.mxu0 0.0
    %2018 = vmatpush1.msra.mxu0 0.0
    %2019 = vmatprep.subr.mxu0 0.0
    %2020 = vmatpush1.msra.mxu0 0.0
    %2021 = vmatprep.mubr.f32.mxu0 0.0
    %2022 = vmatmul.mubr.f32.gmra.mrb[0].mxu0 %v1952
    %v2023 = vpop.f32.mrb[0].mxu0
    %v2024 = vadd.f32 %v1949, %v2023
    %v2025 = vpop.f32.mrb[0].mxu0
    %2026 = vmatprep.mubr.f32.mxu0 0.0
    %2027 = vmatmul.mubr.f32.gmra.mrb[0].mxu0 %v1955
    %v2028 = vpop.f32.mrb[0].mxu0
    %v2029 = vadd.f32 %v1949, %v2028
    %v2030 = vpop.f32.mrb[0].mxu0
    %2031 = vdwg.mxu0
    %v2032 = vld [vmem:[%s11] sm:$0x1]
    %v2033 = vld [vmem:[%s12] sm:$0x1]
    %2034 = vadd.xlane.f32.xlu0 %v2024
    %v2035 = vpop.xlane.xlu0 %2034
    %2036 = vadd.xlane.f32.xlu0 %v2029
    %v2037 = vpop.xlane.xlu0 %2036
    %v2038 = vmul.f32 %v2035, 0.0078125
    %v2039 = vmul.f32 %v2037, 0.0078125
    %v2040 = vsub.f32 %v2024, %v2038
    %v2041 = vsub.f32 %v2029, %v2039
    %v2042 = vmul.f32 %v2040, %v2040
    %v2043 = vmul.f32 %v2041, %v2041
    %2044 = vadd.xlane.f32.xlu0 %v2042
    %v2045 = vpop.xlane.xlu0 %2044
    %2046 = vadd.xlane.f32.xlu0 %v2043
    %v2047 = vpop.xlane.xlu0 %2046
    %v2048 = vmul.f32 %v2045, 0.007874016
    %v2049 = vmul.f32 %v2047, 0.007874016
    %v2050 = vrsqrt.pop %v2048
    %v2051 = vmul.f32 %v2048, %v2050
    %vm2052 = vcmp.eq.f32.partialorder %v2048, inf
    %v2053 = vsel %vm2052, %v2048, %v2051
    %vm2054 = vcmp.eq.f32.partialorder %v2048, 0.0
    %v2055 = vand.u32 %v2048, 2147483648
    %v2056 = vsel %vm2054, %v2055, %v2053
    %v2057 = vrsqrt.pop %v2049
    %v2058 = vmul.f32 %v2049, %v2057
    %vm2059 = vcmp.eq.f32.partialorder %v2049, inf
    %v2060 = vsel %vm2059, %v2049, %v2058
    %vm2061 = vcmp.eq.f32.partialorder %v2049, 0.0
    %v2062 = vand.u32 %v2049, 2147483648
    %v2063 = vsel %vm2061, %v2062, %v2060
    %v2064 = vadd.f32 %v2056, 1e-06
    %v2065 = vadd.f32 %v2063, 1e-06
    %v2066 = vrcp.pop %v2064
    %v2067 = vrcp.pop %v2065
    %v2069 = vlaneseq
    %v2070 = vshrl.u32 %v2069, 7
    %v2071 = vsub.s32 0, %v2070
    %v2072 = vrot.slane %v2032, %v2071
    %v2074 = vmul.f32 %v2072, %v2040
    %v2075 = vmul.f32 %v2072, %v2041
    %v2076 = vmul.f32 %v2074, %v2066
    %v2077 = vmul.f32 %v2075, %v2067
    %v2079 = vlaneseq
    %v2080 = vshrl.u32 %v2079, 7
    %v2081 = vsub.s32 0, %v2080
    %v2082 = vrot.slane %v2033, %v2081
    %v2084 = vadd.f32 %v2076, %v2082
    %v2085 = vadd.f32 %v2077, %v2082
    %v2086 = vld [vmem:[%s13] sm:$0xff]
    %v2087 = vld [vmem:[%s13 + $0x8] sm:$0xff]
    %v2088 = vld [vmem:[%s13 + $0x10] sm:$0xff]
    %v2089 = vld [vmem:[%s13 + $0x18] sm:$0xff]
    %v2090 = vld [vmem:[%s13 + $0x20] sm:$0xff]
    %v2091 = vld [vmem:[%s13 + $0x28] sm:$0xff]
    %v2092 = vld [vmem:[%s13 + $0x30] sm:$0xff]
    %v2093 = vld [vmem:[%s13 + $0x38] sm:$0xff]
    %v2094 = vld [vmem:[%s13 + $0x40] sm:$0xff]
    %v2095 = vld [vmem:[%s13 + $0x48] sm:$0xff]
    %v2096 = vld [vmem:[%s13 + $0x50] sm:$0xff]
    %v2097 = vld [vmem:[%s13 + $0x58] sm:$0xff]
    %v2098 = vld [vmem:[%s13 + $0x60] sm:$0xff]
    %v2099 = vld [vmem:[%s13 + $0x68] sm:$0xff]
    %v2100 = vld [vmem:[%s13 + $0x70] sm:$0xff]
    %v2101 = vld [vmem:[%s13 + $0x78] sm:$0xff]
    %v2102 = vld [vmem:[%s14] sm:$0x1]
    %v2104 = vlaneseq
    %v2105 = vshrl.u32 %v2104, 7
    %v2106 = vsub.s32 0, %v2105
    %v2107 = vrot.slane %v2102, %v2106
    %2109 = vmatprep.subr.mxu0 0.0
    %2110 = vmatpush1.msra.mxu0 %v2086
    %2111 = vmatprep.subr.mxu0 0.0
    %2112 = vmatpush1.msra.mxu0 %v2087
    %2113 = vmatprep.subr.mxu0 0.0
    %2114 = vmatpush1.msra.mxu0 %v2088
    %2115 = vmatprep.subr.mxu0 0.0
    %2116 = vmatpush1.msra.mxu0 %v2089
    %2117 = vmatprep.subr.mxu0 0.0
    %2118 = vmatpush1.msra.mxu0 %v2090
    %2119 = vmatprep.subr.mxu0 0.0
    %2120 = vmatpush1.msra.mxu0 %v2091
    %2121 = vmatprep.subr.mxu0 0.0
    %2122 = vmatpush1.msra.mxu0 %v2092
    %2123 = vmatprep.subr.mxu0 0.0
    %2124 = vmatpush1.msra.mxu0 %v2093
    %2125 = vmatprep.subr.mxu0 0.0
    %2126 = vmatpush1.msra.mxu0 %v2094
    %2127 = vmatprep.subr.mxu0 0.0
    %2128 = vmatpush1.msra.mxu0 %v2095
    %2129 = vmatprep.subr.mxu0 0.0
    %2130 = vmatpush1.msra.mxu0 %v2096
    %2131 = vmatprep.subr.mxu0 0.0
    %2132 = vmatpush1.msra.mxu0 %v2097
    %2133 = vmatprep.subr.mxu0 0.0
    %2134 = vmatpush1.msra.mxu0 %v2098
    %2135 = vmatprep.subr.mxu0 0.0
    %2136 = vmatpush1.msra.mxu0 %v2099
    %2137 = vmatprep.subr.mxu0 0.0
    %2138 = vmatpush1.msra.mxu0 %v2100
    %2139 = vmatprep.subr.mxu0 0.0
    %2140 = vmatpush1.msra.mxu0 %v2101
    %2141 = vmatprep.subr.mxu0 0.0
    %2142 = vmatpush1.msra.mxu0 0.0
    %2143 = vmatprep.subr.mxu0 0.0
    %2144 = vmatpush1.msra.mxu0 0.0
    %2145 = vmatprep.subr.mxu0 0.0
    %2146 = vmatpush1.msra.mxu0 0.0
    %2147 = vmatprep.subr.mxu0 0.0
    %2148 = vmatpush1.msra.mxu0 0.0
    %2149 = vmatprep.subr.mxu0 0.0
    %2150 = vmatpush1.msra.mxu0 0.0
    %2151 = vmatprep.subr.mxu0 0.0
    %2152 = vmatpush1.msra.mxu0 0.0
    %2153 = vmatprep.subr.mxu0 0.0
    %2154 = vmatpush1.msra.mxu0 0.0
    %2155 = vmatprep.subr.mxu0 0.0
    %2156 = vmatpush1.msra.mxu0 0.0
    %2157 = vmatprep.subr.mxu0 0.0
    %2158 = vmatpush1.msra.mxu0 0.0
    %2159 = vmatprep.subr.mxu0 0.0
    %2160 = vmatpush1.msra.mxu0 0.0
    %2161 = vmatprep.subr.mxu0 0.0
    %2162 = vmatpush1.msra.mxu0 0.0
    %2163 = vmatprep.subr.mxu0 0.0
    %2164 = vmatpush1.msra.mxu0 0.0
    %2165 = vmatprep.subr.mxu0 0.0
    %2166 = vmatpush1.msra.mxu0 0.0
    %2167 = vmatprep.subr.mxu0 0.0
    %2168 = vmatpush1.msra.mxu0 0.0
    %2169 = vmatprep.subr.mxu0 0.0
    %2170 = vmatpush1.msra.mxu0 0.0
    %2171 = vmatprep.subr.mxu0 0.0
    %2172 = vmatpush1.msra.mxu0 0.0
    %2173 = vmatprep.mubr.f32.mxu0 0.0
    %2174 = vmatmul.mubr.f32.gmra.mrb[0].mxu0 %v2084
    %v2175 = vpop.f32.mrb[0].mxu0
    %v2176 = vadd.f32 %v2107, %v2175
    %v2177 = vpop.f32.mrb[0].mxu0
    %2178 = vmatprep.mubr.f32.mxu0 0.0
    %2179 = vmatmul.mubr.f32.gmra.mrb[0].mxu0 %v2085
    %v2180 = vpop.f32.mrb[0].mxu0
    %v2181 = vadd.f32 %v2107, %v2180
    %v2182 = vpop.f32.mrb[0].mxu0
    %2183 = vdwg.mxu0
    %v2184 = vld [vmem:[%s15] sm:$0x1]
    %v2185 = vld [vmem:[%s16] sm:$0x1]
    %v2186 = vsel %vm67, %v2176, 0.0
    %2187 = vadd.xlane.f32.xlu0 %v2186
    %v2188 = vpop.xlane.xlu0 %2187
    %v2189 = vsel %vm67, %v2181, 0.0
    %2190 = vadd.xlane.f32.xlu0 %v2189
    %v2191 = vpop.xlane.xlu0 %2190
    %v2192 = vmul.f32 %v2188, 0.03125
    %v2193 = vmul.f32 %v2191, 0.03125
    %v2194 = vsub.f32 %v2176, %v2192
    %v2195 = vsub.f32 %v2181, %v2193
    %v2196 = vmul.f32 %v2194, %v2194
    %v2197 = vmul.f32 %v2195, %v2195
    %v2198 = vsel %vm67, %v2196, 0.0
    %2199 = vadd.xlane.f32.xlu0 %v2198
    %v2200 = vpop.xlane.xlu0 %2199
    %v2201 = vsel %vm67, %v2197, 0.0
    %2202 = vadd.xlane.f32.xlu0 %v2201
    %v2203 = vpop.xlane.xlu0 %2202
    %v2204 = vmul.f32 %v2200, 0.032258064
    %v2205 = vmul.f32 %v2203, 0.032258064
    %v2206 = vrsqrt.pop %v2204
    %v2207 = vmul.f32 %v2204, %v2206
    %vm2208 = vcmp.eq.f32.partialorder %v2204, inf
    %v2209 = vsel %vm2208, %v2204, %v2207
    %vm2210 = vcmp.eq.f32.partialorder %v2204, 0.0
    %v2211 = vand.u32 %v2204, 2147483648
    %v2212 = vsel %vm2210, %v2211, %v2209
    %v2213 = vrsqrt.pop %v2205
    %v2214 = vmul.f32 %v2205, %v2213
    %vm2215 = vcmp.eq.f32.partialorder %v2205, inf
    %v2216 = vsel %vm2215, %v2205, %v2214
    %vm2217 = vcmp.eq.f32.partialorder %v2205, 0.0
    %v2218 = vand.u32 %v2205, 2147483648
    %v2219 = vsel %vm2217, %v2218, %v2216
    %v2220 = vadd.f32 %v2212, 1e-06
    %v2221 = vadd.f32 %v2219, 1e-06
    %v2222 = vrcp.pop %v2220
    %v2223 = vrcp.pop %v2221
    %v2225 = vlaneseq
    %v2226 = vshrl.u32 %v2225, 7
    %v2227 = vsub.s32 0, %v2226
    %v2228 = vrot.slane %v2184, %v2227
    %v2230 = vmul.f32 %v2228, %v2194
    %v2231 = vmul.f32 %v2228, %v2195
    %v2232 = vmul.f32 %v2230, %v2222
    %v2233 = vmul.f32 %v2231, %v2223
    %v2235 = vlaneseq
    %v2236 = vshrl.u32 %v2235, 7
    %v2237 = vsub.s32 0, %v2236
    %v2238 = vrot.slane %v2185, %v2237
    %v2240 = vadd.f32 %v2232, %v2238
    %v2241 = vadd.f32 %v2233, %v2238
    %v2242 = vld [vmem:[%s17] sm:$0xff]
    %v2243 = vld [vmem:[%s17 + $0x8] sm:$0xff]
    %v2244 = vld [vmem:[%s17 + $0x10] sm:$0xff]
    %v2245 = vld [vmem:[%s17 + $0x18] sm:$0xff]
    %v2246 = vld [vmem:[%s18] sm:$0x1]
    %v2248 = vlaneseq
    %v2249 = vshrl.u32 %v2248, 7
    %v2250 = vsub.s32 0, %v2249
    %v2251 = vrot.slane %v2246, %v2250
    %v2254 = vsel %vm67, %v2240, 0
    %v2257 = vsel %vm67, %v2241, 0
    %2259 = vmatprep.subr.mxu0 0.0
    %2260 = vmatpush1.msra.mxu0 %v2242
    %2261 = vmatprep.subr.mxu0 0.0
    %2262 = vmatpush1.msra.mxu0 %v2243
    %2263 = vmatprep.subr.mxu0 0.0
    %2264 = vmatpush1.msra.mxu0 %v2244
    %2265 = vmatprep.subr.mxu0 0.0
    %2266 = vmatpush1.msra.mxu0 %v2245
    %2267 = vmatprep.subr.mxu0 0.0
    %2268 = vmatpush1.msra.mxu0 0.0
    %2269 = vmatprep.subr.mxu0 0.0
    %2270 = vmatpush1.msra.mxu0 0.0
    %2271 = vmatprep.subr.mxu0 0.0
    %2272 = vmatpush1.msra.mxu0 0.0
    %2273 = vmatprep.subr.mxu0 0.0
    %2274 = vmatpush1.msra.mxu0 0.0
    %2275 = vmatprep.subr.mxu0 0.0
    %2276 = vmatpush1.msra.mxu0 0.0
    %2277 = vmatprep.subr.mxu0 0.0
    %2278 = vmatpush1.msra.mxu0 0.0
    %2279 = vmatprep.subr.mxu0 0.0
    %2280 = vmatpush1.msra.mxu0 0.0
    %2281 = vmatprep.subr.mxu0 0.0
    %2282 = vmatpush1.msra.mxu0 0.0
    %2283 = vmatprep.subr.mxu0 0.0
    %2284 = vmatpush1.msra.mxu0 0.0
    %2285 = vmatprep.subr.mxu0 0.0
    %2286 = vmatpush1.msra.mxu0 0.0
    %2287 = vmatprep.subr.mxu0 0.0
    %2288 = vmatpush1.msra.mxu0 0.0
    %2289 = vmatprep.subr.mxu0 0.0
    %2290 = vmatpush1.msra.mxu0 0.0
    %2291 = vmatprep.subr.mxu0 0.0
    %2292 = vmatpush1.msra.mxu0 0.0
    %2293 = vmatprep.subr.mxu0 0.0
    %2294 = vmatpush1.msra.mxu0 0.0
    %2295 = vmatprep.subr.mxu0 0.0
    %2296 = vmatpush1.msra.mxu0 0.0
    %2297 = vmatprep.subr.mxu0 0.0
    %2298 = vmatpush1.msra.mxu0 0.0
    %2299 = vmatprep.subr.mxu0 0.0
    %2300 = vmatpush1.msra.mxu0 0.0
    %2301 = vmatprep.subr.mxu0 0.0
    %2302 = vmatpush1.msra.mxu0 0.0
    %2303 = vmatprep.subr.mxu0 0.0
    %2304 = vmatpush1.msra.mxu0 0.0
    %2305 = vmatprep.subr.mxu0 0.0
    %2306 = vmatpush1.msra.mxu0 0.0
    %2307 = vmatprep.subr.mxu0 0.0
    %2308 = vmatpush1.msra.mxu0 0.0
    %2309 = vmatprep.subr.mxu0 0.0
    %2310 = vmatpush1.msra.mxu0 0.0
    %2311 = vmatprep.subr.mxu0 0.0
    %2312 = vmatpush1.msra.mxu0 0.0
    %2313 = vmatprep.subr.mxu0 0.0
    %2314 = vmatpush1.msra.mxu0 0.0
    %2315 = vmatprep.subr.mxu0 0.0
    %2316 = vmatpush1.msra.mxu0 0.0
    %2317 = vmatprep.subr.mxu0 0.0
    %2318 = vmatpush1.msra.mxu0 0.0
    %2319 = vmatprep.subr.mxu0 0.0
    %2320 = vmatpush1.msra.mxu0 0.0
    %2321 = vmatprep.subr.mxu0 0.0
    %2322 = vmatpush1.msra.mxu0 0.0
    %2323 = vmatprep.mubr.f32.mxu0 0.0
    %2324 = vmatmul.mubr.f32.gmra.mrb[0].mxu0 %v2254
    %v2325 = vpop.f32.mrb[0].mxu0
    %v2326 = vadd.f32 %v2251, %v2325
    %v2327 = vpop.f32.mrb[0].mxu0
    %2328 = vmatprep.mubr.f32.mxu0 0.0
    %2329 = vmatmul.mubr.f32.gmra.mrb[0].mxu0 %v2257
    %v2330 = vpop.f32.mrb[0].mxu0
    %v2331 = vadd.f32 %v2251, %v2330
    %v2332 = vpop.f32.mrb[0].mxu0
    %2333 = vdwg.mxu0
    %v2334 = vmax.f32 %v2326, 0.0
    %v2335 = vmax.f32 %v2331, 0.0
    %2336 = vst [vmem:[#allocation2] sm:$0xff] %v2334
    %2337 = vst [vmem:[#allocation2 + $0x8] sm:$0xff] %v2335
    // Predicated region
    $region78: #{tpu_custom_call.1} parent=1 // pred_check
      _
    $region79: #{tpu_custom_call.1} parent=1 // pred_check_branch
      %2339 = sbr.rel (0) target = $region81
    $region80: #{tpu_custom_call.1} parent=1 // pred_region
      %s2341 = ssub.s32 256, 256
      %2342 = vsyncadd [#allocation3], %s2341
      %s2343 = sshll.u32 [#allocation2], 4
      %s2344 = int_to_ptr.vmem [resolvable:$true] %s2343
      %2349 = dma.vmem_to_hbm [thread:$0]  %s2344, 256, %s19, [#allocation3], 128, 128, 8
    $region81: #{tpu_custom_call.1} parent=1 // pred_fallthru
      _
    // Predicated region
    $region82: #{tpu_custom_call.1} parent=1 // pred_check
      _
    $region83: #{tpu_custom_call.1} parent=1 // pred_check_branch
      %2351 = sbr.rel (0) target = $region85
    $region84: #{tpu_custom_call.1} parent=1 // pred_region
      %2352 = dma.done [#allocation3], 256
    $region85: #{tpu_custom_call.1} parent=1 // pred_fallthru
      _
    %2353 = vsyncpa [#allocation3], 1

</llo_original>
